<compile_context>
chip_gen: v6e
topology: v6e:2x2x1
jax: 0.10.0
libtpu: 0.0.40
codegen_flags: <defaults>
</compile_context>

<pallas_src>
import functools

import jax
import jax.numpy as jnp
from jax import lax
from jax.experimental import pallas as pl
from jax.experimental.pallas import tpu as pltpu


def ae_decoder_kernel(x_ref,       # (T*B_pad, D)    bf16, time-major flattened (padded) input
                      w_ih1_ref,   # (D, 4*H1)       bf16, lstm_1 input weights (pre-transposed)
                      w_hh1_ref,   # (H1, 4*H1)      bf16, lstm_1 recurrent weights (pre-transposed)
                      b1_ref,      # (1, 4*H1)       f32,  lstm_1 combined bias (b_ih + b_hh)
                      w_ih2_ref,   # (H1, 4)         bf16, lstm_2 input weights (pre-transposed)
                      w_hh2_ref,   # (1, 4)          f32,  lstm_2 recurrent weights (pre-transposed)
                      b2_ref,      # (1, 4)          f32,  lstm_2 combined bias
                      out_ref,     # (B, T)          f32,  tanh(lstm_2 output)
                      *, seq_len, batch, batch_pad):
    T, B, Bp = seq_len, batch, batch_pad
    H1 = w_hh1_ref.shape[0]
    f32 = jnp.float32
    bf16 = jnp.bfloat16
    sigmoid = jax.nn.sigmoid

    w_hh1 = w_hh1_ref[...]
    w_hh2 = w_hh2_ref[...]
    b2 = b2_ref[...]

    # ---- Hoisted time-invariant input projection: one MXU matmul, f32 acc --
    xproj = (jnp.dot(x_ref[...], w_ih1_ref[...], preferred_element_type=f32)
             + b1_ref[...])                                     # (T*Bp, 4*H1)

    # ---- lstm_1 recurrence (PyTorch gate order i, f, g, o), fully unrolled --
    # Per step: ONE small recurrent matmul + one sigmoid pass + a quarter-width
    # tanh; the lstm_2 projection is deferred to after the loop.
    h1 = jnp.zeros((Bp, H1), f32)
    c1 = jnp.zeros((Bp, H1), f32)
    h1_stack = []
    for t in range(T):
        # Sublane-aligned static slice (t*Bp is a multiple of 8).
        gates1 = xproj[t * Bp:(t + 1) * Bp, :] + jnp.dot(
            h1.astype(bf16), w_hh1, preferred_element_type=f32)  # (Bp, 4*H1)
        sg = sigmoid(gates1)                    # one EUP pass, full gate vector
        i1 = sg[:, 0 * H1:1 * H1]
        f1 = sg[:, 1 * H1:2 * H1]
        o1 = sg[:, 3 * H1:4 * H1]
        g1 = jnp.tanh(gates1[:, 2 * H1:3 * H1])  # tanh only on the g quarter
        c1 = f1 * c1 + i1 * g1
        h1 = o1 * jnp.tanh(c1)                                   # (Bp, H1)
        h1_stack.append(h1)

    # ---- Hoisted lstm_2 input projection (off the serial chain) ------------
    # lstm_2 = Sequential(Tanh(), LSTM(H1 -> 1)): one tanh over the whole
    # stack, one batched (T*Bp, H1) x (H1, 4) matmul (bf16 operands, f32 acc).
    h1_all = jnp.concatenate(h1_stack, axis=0)                   # (T*Bp, H1)
    x2_all = jnp.tanh(h1_all)
    g2_all = (jnp.dot(x2_all.astype(bf16), w_ih2_ref[...],
                      preferred_element_type=f32) + b2)          # (T*Bp, 4)

    # ---- lstm_2 recurrence (hidden size 1): matmul-free, fully unrolled -----
    lane = lax.broadcasted_iota(jnp.int32, (Bp, T), 1)
    out = jnp.zeros((Bp, T), f32)
    h2 = jnp.zeros((Bp, 1), f32)
    c2 = jnp.zeros((Bp, 1), f32)
    for t in range(T):
        gates2 = g2_all[t * Bp:(t + 1) * Bp, :] + h2 * w_hh2     # (Bp, 4)
        sg2 = sigmoid(gates2)
        i2 = sg2[:, 0:1]
        f2 = sg2[:, 1:2]
        o2 = sg2[:, 3:4]
        g2 = jnp.tanh(gates2[:, 2:3])
        c2 = f2 * c2 + i2 * g2
        h2 = o2 * jnp.tanh(c2)                                   # (Bp, 1)
        # merge this step's tanh(h2) into lane t of the (Bp, T) result
        out = jnp.where(lane == t, jnp.tanh(h2), out)

    # Single dense store of the real batch rows; output is batch-first (B, T).
    # TODO(synk): at large B, emit lane-dense (T, B) and transpose in wrapper.
    out_ref[...] = out[:B, :]


@jax.jit
def ae_decoder_forward(x, params):
    """x: (B, T, D) batch-first, like the PyTorch module. Returns (B, T)."""
    B, T, D = x.shape
    # Pad batch to the f32 sublane tile so every per-step slice / gate vector
    # is sublane-aligned inside the kernel.
    B_pad = max(8, ((B + 7) // 8) * 8)
    x_p = jnp.pad(x, ((0, B_pad - B), (0, 0), (0, 0)))
    # Time-major flatten so the kernel can do one hoisted input projection.
    # (Tiny copy under jit; folding it into the kernel only pays at large B*T.)
    x_flat = jnp.transpose(x_p, (1, 0, 2)).reshape(T * B_pad, D).astype(jnp.bfloat16)

    w_ih1_t = params["w_ih1"].T.astype(jnp.bfloat16)                 # (D, 4*H1)
    w_hh1_t = params["w_hh1"].T.astype(jnp.bfloat16)                 # (H1, 4*H1)
    b1 = (params["b_ih1"] + params["b_hh1"]).reshape(1, -1).astype(jnp.float32)
    w_ih2_t = params["w_ih2"].T.astype(jnp.bfloat16)                 # (H1, 4)
    w_hh2_t = params["w_hh2"].T.astype(jnp.float32)                  # (1, 4)
    b2 = (params["b_ih2"] + params["b_hh2"]).reshape(1, -1).astype(jnp.float32)

    kernel = functools.partial(ae_decoder_kernel, seq_len=T, batch=B,
                               batch_pad=B_pad)
    return pl.pallas_call(
        kernel,
        out_shape=jax.ShapeDtypeStruct((B, T), jnp.float32),
        in_specs=[pl.BlockSpec(memory_space=pltpu.MemorySpace.VMEM)] * 7,
        out_specs=pl.BlockSpec(memory_space=pltpu.MemorySpace.VMEM),
    )(x_flat, w_ih1_t, w_hh1_t, b1, w_ih2_t, w_hh2_t, b2)


# ------------------------- pure-JAX reference (f32) --------------------------
def _lstm_ref(x, w_ih, w_hh, b_ih, b_hh):
    B, _, _ = x.shape
    H = w_hh.shape[1]

    def step(carry, x_t):
        h, c = carry
        g = x_t @ w_ih.T + h @ w_hh.T + b_ih + b_hh
        i, f, gg, o = jnp.split(g, 4, axis=-1)
        c = jax.nn.sigmoid(f) * c + jax.nn.sigmoid(i) * jnp.tanh(gg)
        h = jax.nn.sigmoid(o) * jnp.tanh(c)
        return (h, c), h

    init = (jnp.zeros((B, H), jnp.float32), jnp.zeros((B, H), jnp.float32))
    _, hs = lax.scan(step, init, jnp.transpose(x, (1, 0, 2)))
    return jnp.transpose(hs, (1, 0, 2))


def ae_decoder_reference(x, p):
    h = _lstm_ref(x, p["w_ih1"], p["w_hh1"], p["b_ih1"], p["b_hh1"])
    y = _lstm_ref(jnp.tanh(h), p["w_ih2"], p["w_hh2"], p["b_ih2"], p["b_hh2"])
    return jnp.tanh(y).squeeze(-1)


# ------------------------- deterministic param init --------------------------
def init_params(key, d_in, h1):
    """PyTorch-style LSTM init: U(-1/sqrt(H), 1/sqrt(H)), gate order [i,f,g,o]."""
    def u(k, shape, bound):
        return jax.random.uniform(k, shape, jnp.float32, -bound, bound)

    ks = jax.random.split(key, 8)
    k1 = 1.0 / jnp.sqrt(h1)
    k2 = 1.0  # hidden_size = 1 for lstm_2
    return {
        "w_ih1": u(ks[0], (4 * h1, d_in), k1),
        "w_hh1": u(ks[1], (4 * h1, h1), k1),
        "b_ih1": u(ks[2], (4 * h1,), k1),
        "b_hh1": u(ks[3], (4 * h1,), k1),
        "w_ih2": u(ks[4], (4 * 1, h1), k2),
        "w_hh2": u(ks[5], (4 * 1, 1), k2),
        "b_ih2": u(ks[6], (4 * 1,), k2),
        "b_hh2": u(ks[7], (4 * 1,), k2),
    }


if __name__ == "__main__":
    # Small args consistent with the module:
    #   text_dim=16, emo_dim=8, people_dim=8  -> D_in = 32
    #   filters[0] = 32                       -> lstm_1 hidden size H1 = 32
    B, T = 2, 8
    text_dim, emo_dim, people_dim = 16, 8, 8
    d_in = text_dim + emo_dim + people_dim
    h1 = 32

    key = jax.random.PRNGKey(0)
    k_x, k_p = jax.random.split(key)
    x = jax.random.normal(k_x, (B, T, d_in), jnp.float32)
    params = init_params(k_p, d_in, h1)

    out = ae_decoder_forward(x, params)
    out = jax.block_until_ready(out)

    ref = ae_decoder_reference(x, params)
    assert out.shape == (B, T), out.shape
    # Tolerance accounts for bf16 MXU operands (f32 accumulation) through the
    # 8-step recurrence; outputs are tanh-bounded in [-1, 1].
    assert jnp.allclose(out, ref, atol=3e-2, rtol=0.0), (
        f"max abs diff = {jnp.max(jnp.abs(out - ref))}")

    print("KERNEL_OK")
</pallas_src>

<mosaic_0001>
module attributes {stable_mosaic.version = 11 : i64} {
  func.func @ae_decoder_kernel(%arg0: memref<64x32xbf16, #tpu.memory_space<vmem>>, %arg1: memref<32x128xbf16, #tpu.memory_space<vmem>>, %arg2: memref<32x128xbf16, #tpu.memory_space<vmem>>, %arg3: memref<1x128xf32, #tpu.memory_space<vmem>>, %arg4: memref<32x4xbf16, #tpu.memory_space<vmem>>, %arg5: memref<1x4xf32, #tpu.memory_space<vmem>>, %arg6: memref<1x4xf32, #tpu.memory_space<vmem>>, %arg7: memref<2x8xf32, #tpu.memory_space<vmem>>) attributes {dimension_semantics = [], scalar_prefetch = 0 : i64, scratch_operands = 0 : i64, tpu.core_type = #tpu.core_type<tc>} {
    %c0 = arith.constant 0 : index
    %c0_0 = arith.constant 0 : index
    %0 = vector.load %arg2[%c0, %c0_0] : memref<32x128xbf16, #tpu.memory_space<vmem>>, vector<32x128xbf16>
    %c0_1 = arith.constant 0 : index
    %c0_2 = arith.constant 0 : index
    %1 = vector.load %arg5[%c0_1, %c0_2] : memref<1x4xf32, #tpu.memory_space<vmem>>, vector<1x4xf32>
    %c0_3 = arith.constant 0 : index
    %c0_4 = arith.constant 0 : index
    %2 = vector.load %arg6[%c0_3, %c0_4] : memref<1x4xf32, #tpu.memory_space<vmem>>, vector<1x4xf32>
    %c0_5 = arith.constant 0 : index
    %c0_6 = arith.constant 0 : index
    %3 = vector.load %arg0[%c0_5, %c0_6] : memref<64x32xbf16, #tpu.memory_space<vmem>>, vector<64x32xbf16>
    %c0_7 = arith.constant 0 : index
    %c0_8 = arith.constant 0 : index
    %4 = vector.load %arg1[%c0_7, %c0_8] : memref<32x128xbf16, #tpu.memory_space<vmem>>, vector<32x128xbf16>
    %cst = arith.constant dense<0.000000e+00> : vector<64x128xf32>
    %5 = tpu.matmul %3, %4, %cst {dimension_numbers = #tpu.dot_dimension_numbers<[1], [0], [0], [1], [0, 0, 1, 1], [], []>} : vector<64x32xbf16>, vector<32x128xbf16>, vector<64x128xf32> -> vector<64x128xf32>
    %c0_9 = arith.constant 0 : index
    %c0_10 = arith.constant 0 : index
    %6 = vector.load %arg3[%c0_9, %c0_10] : memref<1x128xf32, #tpu.memory_space<vmem>>, vector<1x128xf32>
    %7 = vector.broadcast %6 : vector<1x128xf32> to vector<64x128xf32>
    %8 = arith.addf %5, %7 : vector<64x128xf32>
    %cst_11 = arith.constant 0.000000e+00 : f32
    %9 = vector.broadcast %cst_11 : f32 to vector<8x32xf32>
    %cst_12 = arith.constant 0.000000e+00 : f32
    %10 = vector.broadcast %cst_12 : f32 to vector<8x32xf32>
    %11 = vector.extract_strided_slice %8 {offsets = [0, 0], sizes = [8, 128], strides = [1, 1]} : vector<64x128xf32> to vector<8x128xf32>
    %12 = arith.truncf %9 : vector<8x32xf32> to vector<8x32xbf16>
    %cst_13 = arith.constant dense<0.000000e+00> : vector<8x128xf32>
    %13 = tpu.matmul %12, %0, %cst_13 {dimension_numbers = #tpu.dot_dimension_numbers<[1], [0], [0], [1], [0, 0, 1, 1], [], []>} : vector<8x32xbf16>, vector<32x128xbf16>, vector<8x128xf32> -> vector<8x128xf32>
    %14 = arith.addf %11, %13 : vector<8x128xf32>
    %15 = arith.negf %14 : vector<8x128xf32>
    %16 = math.exp %15 : vector<8x128xf32>
    %cst_14 = arith.constant 1.000000e+00 : f32
    %17 = vector.broadcast %cst_14 : f32 to vector<8x128xf32>
    %18 = arith.addf %17, %16 : vector<8x128xf32>
    %19 = arith.divf %17, %18 : vector<8x128xf32>
    %20 = vector.extract_strided_slice %19 {offsets = [0, 0], sizes = [8, 32], strides = [1, 1]} : vector<8x128xf32> to vector<8x32xf32>
    %21 = vector.extract_strided_slice %19 {offsets = [0, 32], sizes = [8, 32], strides = [1, 1]} : vector<8x128xf32> to vector<8x32xf32>
    %22 = vector.extract_strided_slice %19 {offsets = [0, 96], sizes = [8, 32], strides = [1, 1]} : vector<8x128xf32> to vector<8x32xf32>
    %23 = vector.extract_strided_slice %14 {offsets = [0, 64], sizes = [8, 32], strides = [1, 1]} : vector<8x128xf32> to vector<8x32xf32>
    %24 = math.tanh %23 : vector<8x32xf32>
    %25 = arith.mulf %21, %10 : vector<8x32xf32>
    %26 = arith.mulf %20, %24 : vector<8x32xf32>
    %27 = arith.addf %25, %26 : vector<8x32xf32>
    %28 = math.tanh %27 : vector<8x32xf32>
    %29 = arith.mulf %22, %28 : vector<8x32xf32>
    %30 = vector.extract_strided_slice %8 {offsets = [8, 0], sizes = [8, 128], strides = [1, 1]} : vector<64x128xf32> to vector<8x128xf32>
    %31 = arith.truncf %29 : vector<8x32xf32> to vector<8x32xbf16>
    %cst_15 = arith.constant dense<0.000000e+00> : vector<8x128xf32>
    %32 = tpu.matmul %31, %0, %cst_15 {dimension_numbers = #tpu.dot_dimension_numbers<[1], [0], [0], [1], [0, 0, 1, 1], [], []>} : vector<8x32xbf16>, vector<32x128xbf16>, vector<8x128xf32> -> vector<8x128xf32>
    %33 = arith.addf %30, %32 : vector<8x128xf32>
    %34 = arith.negf %33 : vector<8x128xf32>
    %35 = math.exp %34 : vector<8x128xf32>
    %cst_16 = arith.constant 1.000000e+00 : f32
    %36 = vector.broadcast %cst_16 : f32 to vector<8x128xf32>
    %37 = arith.addf %36, %35 : vector<8x128xf32>
    %38 = arith.divf %36, %37 : vector<8x128xf32>
    %39 = vector.extract_strided_slice %38 {offsets = [0, 0], sizes = [8, 32], strides = [1, 1]} : vector<8x128xf32> to vector<8x32xf32>
    %40 = vector.extract_strided_slice %38 {offsets = [0, 32], sizes = [8, 32], strides = [1, 1]} : vector<8x128xf32> to vector<8x32xf32>
    %41 = vector.extract_strided_slice %38 {offsets = [0, 96], sizes = [8, 32], strides = [1, 1]} : vector<8x128xf32> to vector<8x32xf32>
    %42 = vector.extract_strided_slice %33 {offsets = [0, 64], sizes = [8, 32], strides = [1, 1]} : vector<8x128xf32> to vector<8x32xf32>
    %43 = math.tanh %42 : vector<8x32xf32>
    %44 = arith.mulf %40, %27 : vector<8x32xf32>
    %45 = arith.mulf %39, %43 : vector<8x32xf32>
    %46 = arith.addf %44, %45 : vector<8x32xf32>
    %47 = math.tanh %46 : vector<8x32xf32>
    %48 = arith.mulf %41, %47 : vector<8x32xf32>
    %49 = vector.extract_strided_slice %8 {offsets = [16, 0], sizes = [8, 128], strides = [1, 1]} : vector<64x128xf32> to vector<8x128xf32>
    %50 = arith.truncf %48 : vector<8x32xf32> to vector<8x32xbf16>
    %cst_17 = arith.constant dense<0.000000e+00> : vector<8x128xf32>
    %51 = tpu.matmul %50, %0, %cst_17 {dimension_numbers = #tpu.dot_dimension_numbers<[1], [0], [0], [1], [0, 0, 1, 1], [], []>} : vector<8x32xbf16>, vector<32x128xbf16>, vector<8x128xf32> -> vector<8x128xf32>
    %52 = arith.addf %49, %51 : vector<8x128xf32>
    %53 = arith.negf %52 : vector<8x128xf32>
    %54 = math.exp %53 : vector<8x128xf32>
    %cst_18 = arith.constant 1.000000e+00 : f32
    %55 = vector.broadcast %cst_18 : f32 to vector<8x128xf32>
    %56 = arith.addf %55, %54 : vector<8x128xf32>
    %57 = arith.divf %55, %56 : vector<8x128xf32>
    %58 = vector.extract_strided_slice %57 {offsets = [0, 0], sizes = [8, 32], strides = [1, 1]} : vector<8x128xf32> to vector<8x32xf32>
    %59 = vector.extract_strided_slice %57 {offsets = [0, 32], sizes = [8, 32], strides = [1, 1]} : vector<8x128xf32> to vector<8x32xf32>
    %60 = vector.extract_strided_slice %57 {offsets = [0, 96], sizes = [8, 32], strides = [1, 1]} : vector<8x128xf32> to vector<8x32xf32>
    %61 = vector.extract_strided_slice %52 {offsets = [0, 64], sizes = [8, 32], strides = [1, 1]} : vector<8x128xf32> to vector<8x32xf32>
    %62 = math.tanh %61 : vector<8x32xf32>
    %63 = arith.mulf %59, %46 : vector<8x32xf32>
    %64 = arith.mulf %58, %62 : vector<8x32xf32>
    %65 = arith.addf %63, %64 : vector<8x32xf32>
    %66 = math.tanh %65 : vector<8x32xf32>
    %67 = arith.mulf %60, %66 : vector<8x32xf32>
    %68 = vector.extract_strided_slice %8 {offsets = [24, 0], sizes = [8, 128], strides = [1, 1]} : vector<64x128xf32> to vector<8x128xf32>
    %69 = arith.truncf %67 : vector<8x32xf32> to vector<8x32xbf16>
    %cst_19 = arith.constant dense<0.000000e+00> : vector<8x128xf32>
    %70 = tpu.matmul %69, %0, %cst_19 {dimension_numbers = #tpu.dot_dimension_numbers<[1], [0], [0], [1], [0, 0, 1, 1], [], []>} : vector<8x32xbf16>, vector<32x128xbf16>, vector<8x128xf32> -> vector<8x128xf32>
    %71 = arith.addf %68, %70 : vector<8x128xf32>
    %72 = arith.negf %71 : vector<8x128xf32>
    %73 = math.exp %72 : vector<8x128xf32>
    %cst_20 = arith.constant 1.000000e+00 : f32
    %74 = vector.broadcast %cst_20 : f32 to vector<8x128xf32>
    %75 = arith.addf %74, %73 : vector<8x128xf32>
    %76 = arith.divf %74, %75 : vector<8x128xf32>
    %77 = vector.extract_strided_slice %76 {offsets = [0, 0], sizes = [8, 32], strides = [1, 1]} : vector<8x128xf32> to vector<8x32xf32>
    %78 = vector.extract_strided_slice %76 {offsets = [0, 32], sizes = [8, 32], strides = [1, 1]} : vector<8x128xf32> to vector<8x32xf32>
    %79 = vector.extract_strided_slice %76 {offsets = [0, 96], sizes = [8, 32], strides = [1, 1]} : vector<8x128xf32> to vector<8x32xf32>
    %80 = vector.extract_strided_slice %71 {offsets = [0, 64], sizes = [8, 32], strides = [1, 1]} : vector<8x128xf32> to vector<8x32xf32>
    %81 = math.tanh %80 : vector<8x32xf32>
    %82 = arith.mulf %78, %65 : vector<8x32xf32>
    %83 = arith.mulf %77, %81 : vector<8x32xf32>
    %84 = arith.addf %82, %83 : vector<8x32xf32>
    %85 = math.tanh %84 : vector<8x32xf32>
    %86 = arith.mulf %79, %85 : vector<8x32xf32>
    %87 = vector.extract_strided_slice %8 {offsets = [32, 0], sizes = [8, 128], strides = [1, 1]} : vector<64x128xf32> to vector<8x128xf32>
    %88 = arith.truncf %86 : vector<8x32xf32> to vector<8x32xbf16>
    %cst_21 = arith.constant dense<0.000000e+00> : vector<8x128xf32>
    %89 = tpu.matmul %88, %0, %cst_21 {dimension_numbers = #tpu.dot_dimension_numbers<[1], [0], [0], [1], [0, 0, 1, 1], [], []>} : vector<8x32xbf16>, vector<32x128xbf16>, vector<8x128xf32> -> vector<8x128xf32>
    %90 = arith.addf %87, %89 : vector<8x128xf32>
    %91 = arith.negf %90 : vector<8x128xf32>
    %92 = math.exp %91 : vector<8x128xf32>
    %cst_22 = arith.constant 1.000000e+00 : f32
    %93 = vector.broadcast %cst_22 : f32 to vector<8x128xf32>
    %94 = arith.addf %93, %92 : vector<8x128xf32>
    %95 = arith.divf %93, %94 : vector<8x128xf32>
    %96 = vector.extract_strided_slice %95 {offsets = [0, 0], sizes = [8, 32], strides = [1, 1]} : vector<8x128xf32> to vector<8x32xf32>
    %97 = vector.extract_strided_slice %95 {offsets = [0, 32], sizes = [8, 32], strides = [1, 1]} : vector<8x128xf32> to vector<8x32xf32>
    %98 = vector.extract_strided_slice %95 {offsets = [0, 96], sizes = [8, 32], strides = [1, 1]} : vector<8x128xf32> to vector<8x32xf32>
    %99 = vector.extract_strided_slice %90 {offsets = [0, 64], sizes = [8, 32], strides = [1, 1]} : vector<8x128xf32> to vector<8x32xf32>
    %100 = math.tanh %99 : vector<8x32xf32>
    %101 = arith.mulf %97, %84 : vector<8x32xf32>
    %102 = arith.mulf %96, %100 : vector<8x32xf32>
    %103 = arith.addf %101, %102 : vector<8x32xf32>
    %104 = math.tanh %103 : vector<8x32xf32>
    %105 = arith.mulf %98, %104 : vector<8x32xf32>
    %106 = vector.extract_strided_slice %8 {offsets = [40, 0], sizes = [8, 128], strides = [1, 1]} : vector<64x128xf32> to vector<8x128xf32>
    %107 = arith.truncf %105 : vector<8x32xf32> to vector<8x32xbf16>
    %cst_23 = arith.constant dense<0.000000e+00> : vector<8x128xf32>
    %108 = tpu.matmul %107, %0, %cst_23 {dimension_numbers = #tpu.dot_dimension_numbers<[1], [0], [0], [1], [0, 0, 1, 1], [], []>} : vector<8x32xbf16>, vector<32x128xbf16>, vector<8x128xf32> -> vector<8x128xf32>
    %109 = arith.addf %106, %108 : vector<8x128xf32>
    %110 = arith.negf %109 : vector<8x128xf32>
    %111 = math.exp %110 : vector<8x128xf32>
    %cst_24 = arith.constant 1.000000e+00 : f32
    %112 = vector.broadcast %cst_24 : f32 to vector<8x128xf32>
    %113 = arith.addf %112, %111 : vector<8x128xf32>
    %114 = arith.divf %112, %113 : vector<8x128xf32>
    %115 = vector.extract_strided_slice %114 {offsets = [0, 0], sizes = [8, 32], strides = [1, 1]} : vector<8x128xf32> to vector<8x32xf32>
    %116 = vector.extract_strided_slice %114 {offsets = [0, 32], sizes = [8, 32], strides = [1, 1]} : vector<8x128xf32> to vector<8x32xf32>
    %117 = vector.extract_strided_slice %114 {offsets = [0, 96], sizes = [8, 32], strides = [1, 1]} : vector<8x128xf32> to vector<8x32xf32>
    %118 = vector.extract_strided_slice %109 {offsets = [0, 64], sizes = [8, 32], strides = [1, 1]} : vector<8x128xf32> to vector<8x32xf32>
    %119 = math.tanh %118 : vector<8x32xf32>
    %120 = arith.mulf %116, %103 : vector<8x32xf32>
    %121 = arith.mulf %115, %119 : vector<8x32xf32>
    %122 = arith.addf %120, %121 : vector<8x32xf32>
    %123 = math.tanh %122 : vector<8x32xf32>
    %124 = arith.mulf %117, %123 : vector<8x32xf32>
    %125 = vector.extract_strided_slice %8 {offsets = [48, 0], sizes = [8, 128], strides = [1, 1]} : vector<64x128xf32> to vector<8x128xf32>
    %126 = arith.truncf %124 : vector<8x32xf32> to vector<8x32xbf16>
    %cst_25 = arith.constant dense<0.000000e+00> : vector<8x128xf32>
    %127 = tpu.matmul %126, %0, %cst_25 {dimension_numbers = #tpu.dot_dimension_numbers<[1], [0], [0], [1], [0, 0, 1, 1], [], []>} : vector<8x32xbf16>, vector<32x128xbf16>, vector<8x128xf32> -> vector<8x128xf32>
    %128 = arith.addf %125, %127 : vector<8x128xf32>
    %129 = arith.negf %128 : vector<8x128xf32>
    %130 = math.exp %129 : vector<8x128xf32>
    %cst_26 = arith.constant 1.000000e+00 : f32
    %131 = vector.broadcast %cst_26 : f32 to vector<8x128xf32>
    %132 = arith.addf %131, %130 : vector<8x128xf32>
    %133 = arith.divf %131, %132 : vector<8x128xf32>
    %134 = vector.extract_strided_slice %133 {offsets = [0, 0], sizes = [8, 32], strides = [1, 1]} : vector<8x128xf32> to vector<8x32xf32>
    %135 = vector.extract_strided_slice %133 {offsets = [0, 32], sizes = [8, 32], strides = [1, 1]} : vector<8x128xf32> to vector<8x32xf32>
    %136 = vector.extract_strided_slice %133 {offsets = [0, 96], sizes = [8, 32], strides = [1, 1]} : vector<8x128xf32> to vector<8x32xf32>
    %137 = vector.extract_strided_slice %128 {offsets = [0, 64], sizes = [8, 32], strides = [1, 1]} : vector<8x128xf32> to vector<8x32xf32>
    %138 = math.tanh %137 : vector<8x32xf32>
    %139 = arith.mulf %135, %122 : vector<8x32xf32>
    %140 = arith.mulf %134, %138 : vector<8x32xf32>
    %141 = arith.addf %139, %140 : vector<8x32xf32>
    %142 = math.tanh %141 : vector<8x32xf32>
    %143 = arith.mulf %136, %142 : vector<8x32xf32>
    %144 = vector.extract_strided_slice %8 {offsets = [56, 0], sizes = [8, 128], strides = [1, 1]} : vector<64x128xf32> to vector<8x128xf32>
    %145 = arith.truncf %143 : vector<8x32xf32> to vector<8x32xbf16>
    %cst_27 = arith.constant dense<0.000000e+00> : vector<8x128xf32>
    %146 = tpu.matmul %145, %0, %cst_27 {dimension_numbers = #tpu.dot_dimension_numbers<[1], [0], [0], [1], [0, 0, 1, 1], [], []>} : vector<8x32xbf16>, vector<32x128xbf16>, vector<8x128xf32> -> vector<8x128xf32>
    %147 = arith.addf %144, %146 : vector<8x128xf32>
    %148 = arith.negf %147 : vector<8x128xf32>
    %149 = math.exp %148 : vector<8x128xf32>
    %cst_28 = arith.constant 1.000000e+00 : f32
    %150 = vector.broadcast %cst_28 : f32 to vector<8x128xf32>
    %151 = arith.addf %150, %149 : vector<8x128xf32>
    %152 = arith.divf %150, %151 : vector<8x128xf32>
    %153 = vector.extract_strided_slice %152 {offsets = [0, 0], sizes = [8, 32], strides = [1, 1]} : vector<8x128xf32> to vector<8x32xf32>
    %154 = vector.extract_strided_slice %152 {offsets = [0, 32], sizes = [8, 32], strides = [1, 1]} : vector<8x128xf32> to vector<8x32xf32>
    %155 = vector.extract_strided_slice %152 {offsets = [0, 96], sizes = [8, 32], strides = [1, 1]} : vector<8x128xf32> to vector<8x32xf32>
    %156 = vector.extract_strided_slice %147 {offsets = [0, 64], sizes = [8, 32], strides = [1, 1]} : vector<8x128xf32> to vector<8x32xf32>
    %157 = math.tanh %156 : vector<8x32xf32>
    %158 = arith.mulf %154, %141 : vector<8x32xf32>
    %159 = arith.mulf %153, %157 : vector<8x32xf32>
    %160 = arith.addf %158, %159 : vector<8x32xf32>
    %161 = math.tanh %160 : vector<8x32xf32>
    %162 = arith.mulf %155, %161 : vector<8x32xf32>
    %163 = tpu.concatenate %29, %48, %67, %86, %105, %124, %143, %162 in 0 : vector<8x32xf32>, vector<8x32xf32>, vector<8x32xf32>, vector<8x32xf32>, vector<8x32xf32>, vector<8x32xf32>, vector<8x32xf32>, vector<8x32xf32> -> vector<64x32xf32>
    %164 = math.tanh %163 : vector<64x32xf32>
    %165 = arith.truncf %164 : vector<64x32xf32> to vector<64x32xbf16>
    %c0_29 = arith.constant 0 : index
    %c0_30 = arith.constant 0 : index
    %166 = vector.load %arg4[%c0_29, %c0_30] : memref<32x4xbf16, #tpu.memory_space<vmem>>, vector<32x4xbf16>
    %cst_31 = arith.constant dense<0.000000e+00> : vector<64x4xf32>
    %167 = tpu.matmul %165, %166, %cst_31 {dimension_numbers = #tpu.dot_dimension_numbers<[1], [0], [0], [1], [0, 0, 1, 1], [], []>} : vector<64x32xbf16>, vector<32x4xbf16>, vector<64x4xf32> -> vector<64x4xf32>
    %168 = vector.broadcast %2 : vector<1x4xf32> to vector<64x4xf32>
    %169 = arith.addf %167, %168 : vector<64x4xf32>
    %170 = tpu.iota {dimensions = array<i32: 1>} : vector<8x8xi32>
    %cst_32 = arith.constant 0.000000e+00 : f32
    %171 = vector.broadcast %cst_32 : f32 to vector<8x8xf32>
    %cst_33 = arith.constant 0.000000e+00 : f32
    %172 = vector.broadcast %cst_33 : f32 to vector<8x1xf32>
    %cst_34 = arith.constant 0.000000e+00 : f32
    %173 = vector.broadcast %cst_34 : f32 to vector<8x1xf32>
    %174 = vector.extract_strided_slice %169 {offsets = [0, 0], sizes = [8, 4], strides = [1, 1]} : vector<64x4xf32> to vector<8x4xf32>
    %175 = vector.broadcast %172 : vector<8x1xf32> to vector<8x4xf32>
    %176 = vector.broadcast %1 : vector<1x4xf32> to vector<8x4xf32>
    %177 = arith.mulf %175, %176 : vector<8x4xf32>
    %178 = arith.addf %174, %177 : vector<8x4xf32>
    %179 = arith.negf %178 : vector<8x4xf32>
    %180 = math.exp %179 : vector<8x4xf32>
    %cst_35 = arith.constant 1.000000e+00 : f32
    %181 = vector.broadcast %cst_35 : f32 to vector<8x4xf32>
    %182 = arith.addf %181, %180 : vector<8x4xf32>
    %183 = arith.divf %181, %182 : vector<8x4xf32>
    %184 = vector.extract_strided_slice %183 {offsets = [0, 0], sizes = [8, 1], strides = [1, 1]} : vector<8x4xf32> to vector<8x1xf32>
    %185 = vector.extract_strided_slice %183 {offsets = [0, 1], sizes = [8, 1], strides = [1, 1]} : vector<8x4xf32> to vector<8x1xf32>
    %186 = vector.extract_strided_slice %183 {offsets = [0, 3], sizes = [8, 1], strides = [1, 1]} : vector<8x4xf32> to vector<8x1xf32>
    %187 = vector.extract_strided_slice %178 {offsets = [0, 2], sizes = [8, 1], strides = [1, 1]} : vector<8x4xf32> to vector<8x1xf32>
    %188 = math.tanh %187 : vector<8x1xf32>
    %189 = arith.mulf %185, %173 : vector<8x1xf32>
    %190 = arith.mulf %184, %188 : vector<8x1xf32>
    %191 = arith.addf %189, %190 : vector<8x1xf32>
    %192 = math.tanh %191 : vector<8x1xf32>
    %193 = arith.mulf %186, %192 : vector<8x1xf32>
    %c0_i32 = arith.constant 0 : i32
    %194 = vector.broadcast %c0_i32 : i32 to vector<8x8xi32>
    %195 = arith.cmpi eq, %170, %194 : vector<8x8xi32>
    %196 = math.tanh %193 : vector<8x1xf32>
    %197 = vector.shape_cast %196 : vector<8x1xf32> to vector<8x1xf32>
    %198 = vector.broadcast %197 : vector<8x1xf32> to vector<8x8xf32>
    %199 = arith.select %195, %198, %171 : vector<8x8xi1>, vector<8x8xf32>
    %200 = vector.extract_strided_slice %169 {offsets = [8, 0], sizes = [8, 4], strides = [1, 1]} : vector<64x4xf32> to vector<8x4xf32>
    %201 = vector.broadcast %193 : vector<8x1xf32> to vector<8x4xf32>
    %202 = vector.broadcast %1 : vector<1x4xf32> to vector<8x4xf32>
    %203 = arith.mulf %201, %202 : vector<8x4xf32>
    %204 = arith.addf %200, %203 : vector<8x4xf32>
    %205 = arith.negf %204 : vector<8x4xf32>
    %206 = math.exp %205 : vector<8x4xf32>
    %cst_36 = arith.constant 1.000000e+00 : f32
    %207 = vector.broadcast %cst_36 : f32 to vector<8x4xf32>
    %208 = arith.addf %207, %206 : vector<8x4xf32>
    %209 = arith.divf %207, %208 : vector<8x4xf32>
    %210 = vector.extract_strided_slice %209 {offsets = [0, 0], sizes = [8, 1], strides = [1, 1]} : vector<8x4xf32> to vector<8x1xf32>
    %211 = vector.extract_strided_slice %209 {offsets = [0, 1], sizes = [8, 1], strides = [1, 1]} : vector<8x4xf32> to vector<8x1xf32>
    %212 = vector.extract_strided_slice %209 {offsets = [0, 3], sizes = [8, 1], strides = [1, 1]} : vector<8x4xf32> to vector<8x1xf32>
    %213 = vector.extract_strided_slice %204 {offsets = [0, 2], sizes = [8, 1], strides = [1, 1]} : vector<8x4xf32> to vector<8x1xf32>
    %214 = math.tanh %213 : vector<8x1xf32>
    %215 = arith.mulf %211, %191 : vector<8x1xf32>
    %216 = arith.mulf %210, %214 : vector<8x1xf32>
    %217 = arith.addf %215, %216 : vector<8x1xf32>
    %218 = math.tanh %217 : vector<8x1xf32>
    %219 = arith.mulf %212, %218 : vector<8x1xf32>
    %c1_i32 = arith.constant 1 : i32
    %220 = vector.broadcast %c1_i32 : i32 to vector<8x8xi32>
    %221 = arith.cmpi eq, %170, %220 : vector<8x8xi32>
    %222 = math.tanh %219 : vector<8x1xf32>
    %223 = vector.shape_cast %222 : vector<8x1xf32> to vector<8x1xf32>
    %224 = vector.broadcast %223 : vector<8x1xf32> to vector<8x8xf32>
    %225 = arith.select %221, %224, %199 : vector<8x8xi1>, vector<8x8xf32>
    %226 = vector.extract_strided_slice %169 {offsets = [16, 0], sizes = [8, 4], strides = [1, 1]} : vector<64x4xf32> to vector<8x4xf32>
    %227 = vector.broadcast %219 : vector<8x1xf32> to vector<8x4xf32>
    %228 = vector.broadcast %1 : vector<1x4xf32> to vector<8x4xf32>
    %229 = arith.mulf %227, %228 : vector<8x4xf32>
    %230 = arith.addf %226, %229 : vector<8x4xf32>
    %231 = arith.negf %230 : vector<8x4xf32>
    %232 = math.exp %231 : vector<8x4xf32>
    %cst_37 = arith.constant 1.000000e+00 : f32
    %233 = vector.broadcast %cst_37 : f32 to vector<8x4xf32>
    %234 = arith.addf %233, %232 : vector<8x4xf32>
    %235 = arith.divf %233, %234 : vector<8x4xf32>
    %236 = vector.extract_strided_slice %235 {offsets = [0, 0], sizes = [8, 1], strides = [1, 1]} : vector<8x4xf32> to vector<8x1xf32>
    %237 = vector.extract_strided_slice %235 {offsets = [0, 1], sizes = [8, 1], strides = [1, 1]} : vector<8x4xf32> to vector<8x1xf32>
    %238 = vector.extract_strided_slice %235 {offsets = [0, 3], sizes = [8, 1], strides = [1, 1]} : vector<8x4xf32> to vector<8x1xf32>
    %239 = vector.extract_strided_slice %230 {offsets = [0, 2], sizes = [8, 1], strides = [1, 1]} : vector<8x4xf32> to vector<8x1xf32>
    %240 = math.tanh %239 : vector<8x1xf32>
    %241 = arith.mulf %237, %217 : vector<8x1xf32>
    %242 = arith.mulf %236, %240 : vector<8x1xf32>
    %243 = arith.addf %241, %242 : vector<8x1xf32>
    %244 = math.tanh %243 : vector<8x1xf32>
    %245 = arith.mulf %238, %244 : vector<8x1xf32>
    %c2_i32 = arith.constant 2 : i32
    %246 = vector.broadcast %c2_i32 : i32 to vector<8x8xi32>
    %247 = arith.cmpi eq, %170, %246 : vector<8x8xi32>
    %248 = math.tanh %245 : vector<8x1xf32>
    %249 = vector.shape_cast %248 : vector<8x1xf32> to vector<8x1xf32>
    %250 = vector.broadcast %249 : vector<8x1xf32> to vector<8x8xf32>
    %251 = arith.select %247, %250, %225 : vector<8x8xi1>, vector<8x8xf32>
    %252 = vector.extract_strided_slice %169 {offsets = [24, 0], sizes = [8, 4], strides = [1, 1]} : vector<64x4xf32> to vector<8x4xf32>
    %253 = vector.broadcast %245 : vector<8x1xf32> to vector<8x4xf32>
    %254 = vector.broadcast %1 : vector<1x4xf32> to vector<8x4xf32>
    %255 = arith.mulf %253, %254 : vector<8x4xf32>
    %256 = arith.addf %252, %255 : vector<8x4xf32>
    %257 = arith.negf %256 : vector<8x4xf32>
    %258 = math.exp %257 : vector<8x4xf32>
    %cst_38 = arith.constant 1.000000e+00 : f32
    %259 = vector.broadcast %cst_38 : f32 to vector<8x4xf32>
    %260 = arith.addf %259, %258 : vector<8x4xf32>
    %261 = arith.divf %259, %260 : vector<8x4xf32>
    %262 = vector.extract_strided_slice %261 {offsets = [0, 0], sizes = [8, 1], strides = [1, 1]} : vector<8x4xf32> to vector<8x1xf32>
    %263 = vector.extract_strided_slice %261 {offsets = [0, 1], sizes = [8, 1], strides = [1, 1]} : vector<8x4xf32> to vector<8x1xf32>
    %264 = vector.extract_strided_slice %261 {offsets = [0, 3], sizes = [8, 1], strides = [1, 1]} : vector<8x4xf32> to vector<8x1xf32>
    %265 = vector.extract_strided_slice %256 {offsets = [0, 2], sizes = [8, 1], strides = [1, 1]} : vector<8x4xf32> to vector<8x1xf32>
    %266 = math.tanh %265 : vector<8x1xf32>
    %267 = arith.mulf %263, %243 : vector<8x1xf32>
    %268 = arith.mulf %262, %266 : vector<8x1xf32>
    %269 = arith.addf %267, %268 : vector<8x1xf32>
    %270 = math.tanh %269 : vector<8x1xf32>
    %271 = arith.mulf %264, %270 : vector<8x1xf32>
    %c3_i32 = arith.constant 3 : i32
    %272 = vector.broadcast %c3_i32 : i32 to vector<8x8xi32>
    %273 = arith.cmpi eq, %170, %272 : vector<8x8xi32>
    %274 = math.tanh %271 : vector<8x1xf32>
    %275 = vector.shape_cast %274 : vector<8x1xf32> to vector<8x1xf32>
    %276 = vector.broadcast %275 : vector<8x1xf32> to vector<8x8xf32>
    %277 = arith.select %273, %276, %251 : vector<8x8xi1>, vector<8x8xf32>
    %278 = vector.extract_strided_slice %169 {offsets = [32, 0], sizes = [8, 4], strides = [1, 1]} : vector<64x4xf32> to vector<8x4xf32>
    %279 = vector.broadcast %271 : vector<8x1xf32> to vector<8x4xf32>
    %280 = vector.broadcast %1 : vector<1x4xf32> to vector<8x4xf32>
    %281 = arith.mulf %279, %280 : vector<8x4xf32>
    %282 = arith.addf %278, %281 : vector<8x4xf32>
    %283 = arith.negf %282 : vector<8x4xf32>
    %284 = math.exp %283 : vector<8x4xf32>
    %cst_39 = arith.constant 1.000000e+00 : f32
    %285 = vector.broadcast %cst_39 : f32 to vector<8x4xf32>
    %286 = arith.addf %285, %284 : vector<8x4xf32>
    %287 = arith.divf %285, %286 : vector<8x4xf32>
    %288 = vector.extract_strided_slice %287 {offsets = [0, 0], sizes = [8, 1], strides = [1, 1]} : vector<8x4xf32> to vector<8x1xf32>
    %289 = vector.extract_strided_slice %287 {offsets = [0, 1], sizes = [8, 1], strides = [1, 1]} : vector<8x4xf32> to vector<8x1xf32>
    %290 = vector.extract_strided_slice %287 {offsets = [0, 3], sizes = [8, 1], strides = [1, 1]} : vector<8x4xf32> to vector<8x1xf32>
    %291 = vector.extract_strided_slice %282 {offsets = [0, 2], sizes = [8, 1], strides = [1, 1]} : vector<8x4xf32> to vector<8x1xf32>
    %292 = math.tanh %291 : vector<8x1xf32>
    %293 = arith.mulf %289, %269 : vector<8x1xf32>
    %294 = arith.mulf %288, %292 : vector<8x1xf32>
    %295 = arith.addf %293, %294 : vector<8x1xf32>
    %296 = math.tanh %295 : vector<8x1xf32>
    %297 = arith.mulf %290, %296 : vector<8x1xf32>
    %c4_i32 = arith.constant 4 : i32
    %298 = vector.broadcast %c4_i32 : i32 to vector<8x8xi32>
    %299 = arith.cmpi eq, %170, %298 : vector<8x8xi32>
    %300 = math.tanh %297 : vector<8x1xf32>
    %301 = vector.shape_cast %300 : vector<8x1xf32> to vector<8x1xf32>
    %302 = vector.broadcast %301 : vector<8x1xf32> to vector<8x8xf32>
    %303 = arith.select %299, %302, %277 : vector<8x8xi1>, vector<8x8xf32>
    %304 = vector.extract_strided_slice %169 {offsets = [40, 0], sizes = [8, 4], strides = [1, 1]} : vector<64x4xf32> to vector<8x4xf32>
    %305 = vector.broadcast %297 : vector<8x1xf32> to vector<8x4xf32>
    %306 = vector.broadcast %1 : vector<1x4xf32> to vector<8x4xf32>
    %307 = arith.mulf %305, %306 : vector<8x4xf32>
    %308 = arith.addf %304, %307 : vector<8x4xf32>
    %309 = arith.negf %308 : vector<8x4xf32>
    %310 = math.exp %309 : vector<8x4xf32>
    %cst_40 = arith.constant 1.000000e+00 : f32
    %311 = vector.broadcast %cst_40 : f32 to vector<8x4xf32>
    %312 = arith.addf %311, %310 : vector<8x4xf32>
    %313 = arith.divf %311, %312 : vector<8x4xf32>
    %314 = vector.extract_strided_slice %313 {offsets = [0, 0], sizes = [8, 1], strides = [1, 1]} : vector<8x4xf32> to vector<8x1xf32>
    %315 = vector.extract_strided_slice %313 {offsets = [0, 1], sizes = [8, 1], strides = [1, 1]} : vector<8x4xf32> to vector<8x1xf32>
    %316 = vector.extract_strided_slice %313 {offsets = [0, 3], sizes = [8, 1], strides = [1, 1]} : vector<8x4xf32> to vector<8x1xf32>
    %317 = vector.extract_strided_slice %308 {offsets = [0, 2], sizes = [8, 1], strides = [1, 1]} : vector<8x4xf32> to vector<8x1xf32>
    %318 = math.tanh %317 : vector<8x1xf32>
    %319 = arith.mulf %315, %295 : vector<8x1xf32>
    %320 = arith.mulf %314, %318 : vector<8x1xf32>
    %321 = arith.addf %319, %320 : vector<8x1xf32>
    %322 = math.tanh %321 : vector<8x1xf32>
    %323 = arith.mulf %316, %322 : vector<8x1xf32>
    %c5_i32 = arith.constant 5 : i32
    %324 = vector.broadcast %c5_i32 : i32 to vector<8x8xi32>
    %325 = arith.cmpi eq, %170, %324 : vector<8x8xi32>
    %326 = math.tanh %323 : vector<8x1xf32>
    %327 = vector.shape_cast %326 : vector<8x1xf32> to vector<8x1xf32>
    %328 = vector.broadcast %327 : vector<8x1xf32> to vector<8x8xf32>
    %329 = arith.select %325, %328, %303 : vector<8x8xi1>, vector<8x8xf32>
    %330 = vector.extract_strided_slice %169 {offsets = [48, 0], sizes = [8, 4], strides = [1, 1]} : vector<64x4xf32> to vector<8x4xf32>
    %331 = vector.broadcast %323 : vector<8x1xf32> to vector<8x4xf32>
    %332 = vector.broadcast %1 : vector<1x4xf32> to vector<8x4xf32>
    %333 = arith.mulf %331, %332 : vector<8x4xf32>
    %334 = arith.addf %330, %333 : vector<8x4xf32>
    %335 = arith.negf %334 : vector<8x4xf32>
    %336 = math.exp %335 : vector<8x4xf32>
    %cst_41 = arith.constant 1.000000e+00 : f32
    %337 = vector.broadcast %cst_41 : f32 to vector<8x4xf32>
    %338 = arith.addf %337, %336 : vector<8x4xf32>
    %339 = arith.divf %337, %338 : vector<8x4xf32>
    %340 = vector.extract_strided_slice %339 {offsets = [0, 0], sizes = [8, 1], strides = [1, 1]} : vector<8x4xf32> to vector<8x1xf32>
    %341 = vector.extract_strided_slice %339 {offsets = [0, 1], sizes = [8, 1], strides = [1, 1]} : vector<8x4xf32> to vector<8x1xf32>
    %342 = vector.extract_strided_slice %339 {offsets = [0, 3], sizes = [8, 1], strides = [1, 1]} : vector<8x4xf32> to vector<8x1xf32>
    %343 = vector.extract_strided_slice %334 {offsets = [0, 2], sizes = [8, 1], strides = [1, 1]} : vector<8x4xf32> to vector<8x1xf32>
    %344 = math.tanh %343 : vector<8x1xf32>
    %345 = arith.mulf %341, %321 : vector<8x1xf32>
    %346 = arith.mulf %340, %344 : vector<8x1xf32>
    %347 = arith.addf %345, %346 : vector<8x1xf32>
    %348 = math.tanh %347 : vector<8x1xf32>
    %349 = arith.mulf %342, %348 : vector<8x1xf32>
    %c6_i32 = arith.constant 6 : i32
    %350 = vector.broadcast %c6_i32 : i32 to vector<8x8xi32>
    %351 = arith.cmpi eq, %170, %350 : vector<8x8xi32>
    %352 = math.tanh %349 : vector<8x1xf32>
    %353 = vector.shape_cast %352 : vector<8x1xf32> to vector<8x1xf32>
    %354 = vector.broadcast %353 : vector<8x1xf32> to vector<8x8xf32>
    %355 = arith.select %351, %354, %329 : vector<8x8xi1>, vector<8x8xf32>
    %356 = vector.extract_strided_slice %169 {offsets = [56, 0], sizes = [8, 4], strides = [1, 1]} : vector<64x4xf32> to vector<8x4xf32>
    %357 = vector.broadcast %349 : vector<8x1xf32> to vector<8x4xf32>
    %358 = vector.broadcast %1 : vector<1x4xf32> to vector<8x4xf32>
    %359 = arith.mulf %357, %358 : vector<8x4xf32>
    %360 = arith.addf %356, %359 : vector<8x4xf32>
    %361 = arith.negf %360 : vector<8x4xf32>
    %362 = math.exp %361 : vector<8x4xf32>
    %cst_42 = arith.constant 1.000000e+00 : f32
    %363 = vector.broadcast %cst_42 : f32 to vector<8x4xf32>
    %364 = arith.addf %363, %362 : vector<8x4xf32>
    %365 = arith.divf %363, %364 : vector<8x4xf32>
    %366 = vector.extract_strided_slice %365 {offsets = [0, 0], sizes = [8, 1], strides = [1, 1]} : vector<8x4xf32> to vector<8x1xf32>
    %367 = vector.extract_strided_slice %365 {offsets = [0, 1], sizes = [8, 1], strides = [1, 1]} : vector<8x4xf32> to vector<8x1xf32>
    %368 = vector.extract_strided_slice %365 {offsets = [0, 3], sizes = [8, 1], strides = [1, 1]} : vector<8x4xf32> to vector<8x1xf32>
    %369 = vector.extract_strided_slice %360 {offsets = [0, 2], sizes = [8, 1], strides = [1, 1]} : vector<8x4xf32> to vector<8x1xf32>
    %370 = math.tanh %369 : vector<8x1xf32>
    %371 = arith.mulf %367, %347 : vector<8x1xf32>
    %372 = arith.mulf %366, %370 : vector<8x1xf32>
    %373 = arith.addf %371, %372 : vector<8x1xf32>
    %374 = math.tanh %373 : vector<8x1xf32>
    %375 = arith.mulf %368, %374 : vector<8x1xf32>
    %c7_i32 = arith.constant 7 : i32
    %376 = vector.broadcast %c7_i32 : i32 to vector<8x8xi32>
    %377 = arith.cmpi eq, %170, %376 : vector<8x8xi32>
    %378 = math.tanh %375 : vector<8x1xf32>
    %379 = vector.shape_cast %378 : vector<8x1xf32> to vector<8x1xf32>
    %380 = vector.broadcast %379 : vector<8x1xf32> to vector<8x8xf32>
    %381 = arith.select %377, %380, %355 : vector<8x8xi1>, vector<8x8xf32>
    %382 = vector.extract_strided_slice %381 {offsets = [0, 0], sizes = [2, 8], strides = [1, 1]} : vector<8x8xf32> to vector<2x8xf32>
    %c0_43 = arith.constant 0 : index
    %c0_44 = arith.constant 0 : index
    %383 = vector.load %arg7[%c0_43, %c0_44] : memref<2x8xf32, #tpu.memory_space<vmem>>, vector<2x8xf32>
    tpu.vector_store %arg7[%c0_43, %c0_44], %382 {strides = array<i32>} : memref<2x8xf32, #tpu.memory_space<vmem>>, vector<2x8xf32>,
    return
  }
}

</mosaic_0001>

<llo_original>
// kernel: ae_decoder_forward.1
$region0: #{ae_decoder_forward.1}
  #allocation0 [shape = 'u32[]', space=smem, size = 0x4, offset = 0x4, fixed_abs, tag = 'smem constant byte address 0x4 - core index']
  #allocation1 [shape = 'u32[144,128]{1,0:T(1,128)}', space=vmem, size = 0x12000, scoped, tag = 'internal scratch']
  %s0 = inlined_call_operand.vmem [shape: bf16[64,32], index: 0, kind: input, shape index: {}]
  %s1 = inlined_call_operand.vmem [shape: bf16[32,128], index: 1, kind: input, shape index: {}]
  %s2 = inlined_call_operand.vmem [shape: bf16[32,128], index: 2, kind: input, shape index: {}]
  %s3 = inlined_call_operand.vmem [shape: f32[1,128], index: 3, kind: input, shape index: {}]
  %s4 = inlined_call_operand.vmem [shape: bf16[32,4], index: 4, kind: input, shape index: {}]
  %s5 = inlined_call_operand.vmem [shape: f32[1,4], index: 5, kind: input, shape index: {}]
  %s6 = inlined_call_operand.vmem [shape: f32[1,4], index: 6, kind: input, shape index: {}]
  %s7 = inlined_call_operand.hbm [shape: f32[2,8], index: 7, kind: output, shape index: {}]
  %s8 = sld [smem:[#allocation0]]
  $region38: #{ae_decoder_forward.1} parent=0
    _
  %s10 = ssub.s32 1, %s8
  %s11 = scalar_select 0, %s10, %s8
  $region1: #{ae_decoder_forward.1} parent=0
    #allocation2 [shape = 'u8[1024]{0}', space=vmem, size = 0x400, scoped, tag = 'output window, operand 0, single buffered']
    #allocation3 [shape = 's32[1]{0}', space=sflag, size = 0x4, scoped, tag = 'scoped memory for ae_decoder_forward.1']
    %12 = vsyncpa [#allocation3], 0
    // Predicated region
    $region2: #{ae_decoder_forward.1} parent=1 // pred_check
      _
    $region3: #{ae_decoder_forward.1} parent=1 // pred_check_branch
      %14 = sbr.rel (0) target = $region5
    $region4: #{ae_decoder_forward.1} parent=1 // pred_region
      _
    $region5: #{ae_decoder_forward.1} parent=1 // pred_fallthru
      _
    // Predicated region
    $region6: #{ae_decoder_forward.1} parent=1 // pred_check
      _
    $region7: #{ae_decoder_forward.1} parent=1 // pred_check_branch
      %16 = sbr.rel (0) target = $region9
    $region8: #{ae_decoder_forward.1} parent=1 // pred_region
      _
    $region9: #{ae_decoder_forward.1} parent=1 // pred_fallthru
      _
    // Predicated region
    $region10: #{ae_decoder_forward.1} parent=1 // pred_check
      _
    $region11: #{ae_decoder_forward.1} parent=1 // pred_check_branch
      %18 = sbr.rel (0) target = $region13
    $region12: #{ae_decoder_forward.1} parent=1 // pred_region
      _
    $region13: #{ae_decoder_forward.1} parent=1 // pred_fallthru
      _
    // Predicated region
    $region14: #{ae_decoder_forward.1} parent=1 // pred_check
      _
    $region15: #{ae_decoder_forward.1} parent=1 // pred_check_branch
      %20 = sbr.rel (0) target = $region17
    $region16: #{ae_decoder_forward.1} parent=1 // pred_region
      _
    $region17: #{ae_decoder_forward.1} parent=1 // pred_fallthru
      _
    // Predicated region
    $region18: #{ae_decoder_forward.1} parent=1 // pred_check
      _
    $region19: #{ae_decoder_forward.1} parent=1 // pred_check_branch
      %22 = sbr.rel (0) target = $region21
    $region20: #{ae_decoder_forward.1} parent=1 // pred_region
      _
    $region21: #{ae_decoder_forward.1} parent=1 // pred_fallthru
      _
    // Predicated region
    $region22: #{ae_decoder_forward.1} parent=1 // pred_check
      _
    $region23: #{ae_decoder_forward.1} parent=1 // pred_check_branch
      %24 = sbr.rel (0) target = $region25
    $region24: #{ae_decoder_forward.1} parent=1 // pred_region
      _
    $region25: #{ae_decoder_forward.1} parent=1 // pred_fallthru
      _
    // Predicated region
    $region26: #{ae_decoder_forward.1} parent=1 // pred_check
      _
    $region27: #{ae_decoder_forward.1} parent=1 // pred_check_branch
      %26 = sbr.rel (0) target = $region29
    $region28: #{ae_decoder_forward.1} parent=1 // pred_region
      _
    $region29: #{ae_decoder_forward.1} parent=1 // pred_fallthru
      _
    %v28 = vld [vmem:[%s2] sm:$0xf]
    %v29 = vld [vmem:[%s2 + $0x4] sm:$0xf]
    %v30 = vld [vmem:[%s2 + $0x8] sm:$0xf]
    %v31 = vld [vmem:[%s2 + $0xc] sm:$0xf]
    %v32 = vld [vmem:[%s5] sm:$0x1]
    %v33 = vld [vmem:[%s6] sm:$0x1]
    %v34 = vld [vmem:[%s0] sm:$0xf]
    %v35 = vld [vmem:[%s0 + $0x4] sm:$0xf]
    %v36 = vld [vmem:[%s0 + $0x8] sm:$0xf]
    %v37 = vld [vmem:[%s0 + $0xc] sm:$0xf]
    %v38 = vld [vmem:[%s0 + $0x10] sm:$0xf]
    %v39 = vld [vmem:[%s0 + $0x14] sm:$0xf]
    %v40 = vld [vmem:[%s0 + $0x18] sm:$0xf]
    %v41 = vld [vmem:[%s0 + $0x1c] sm:$0xf]
    %v42 = vld [vmem:[%s1] sm:$0xf]
    %v43 = vld [vmem:[%s1 + $0x4] sm:$0xf]
    %v44 = vld [vmem:[%s1 + $0x8] sm:$0xf]
    %v45 = vld [vmem:[%s1 + $0xc] sm:$0xf]
    %v46 = vld [vmem:[%s3] sm:$0x1]
    %v48 = vlaneseq
    %v49 = vshrl.u32 %v48, 7
    %v50 = vsub.s32 0, %v49
    %v51 = vrot.slane %v46, %v50
    %v61 = vunpack.c.l.b16 %v34
    %v62 = vunpack.c.l.b16 %v35
    %v63 = vunpack.c.l.b16 %v36
    %v64 = vunpack.c.l.b16 %v37
    %v65 = vunpack.c.l.b16 %v38
    %v66 = vunpack.c.l.b16 %v39
    %v67 = vunpack.c.l.b16 %v40
    %v68 = vunpack.c.l.b16 %v41
    %v69 = vpack.c.b16 %v62, %v61
    %v70 = vpack.c.b16 %v64, %v63
    %v71 = vpack.c.b16 %v66, %v65
    %v72 = vpack.c.b16 %v68, %v67
    %v77 = vunpack.c.l.b16 %v42
    %v78 = vunpack.c.l.b16 %v43
    %v79 = vunpack.c.l.b16 %v44
    %v80 = vunpack.c.l.b16 %v45
    %v81 = vpack.c.b16 %v78, %v77
    %v82 = vpack.c.b16 %v80, %v79
    %vm85 = vcmask 261120
    %v87 = vsel %vm85, %v69, 0
    %v90 = vsel %vm85, %v70, 0
    %v93 = vsel %vm85, %v71, 0
    %v96 = vsel %vm85, %v72, 0
    %98 = vmatprep.subr.bf16.mxu0 0
    %99 = vmatpush1.bf16.msra.mxu0 0
    %100 = vmatprep.subr.bf16.mxu0 0
    %101 = vmatpush1.bf16.msra.mxu0 0
    %102 = vmatprep.subr.bf16.mxu0 0
    %103 = vmatpush1.bf16.msra.mxu0 0
    %104 = vmatprep.subr.bf16.mxu0 0
    %105 = vmatpush1.bf16.msra.mxu0 0
    %106 = vmatprep.subr.bf16.mxu0 0
    %107 = vmatpush1.bf16.msra.mxu0 0
    %108 = vmatprep.subr.bf16.mxu0 0
    %109 = vmatpush1.bf16.msra.mxu0 0
    %110 = vmatprep.subr.bf16.mxu0 0
    %111 = vmatpush1.bf16.msra.mxu0 %v82
    %112 = vmatprep.subr.bf16.mxu0 0
    %113 = vmatpush1.bf16.msra.mxu0 %v81
    %114 = vmatprep.subr.bf16.mxu0 0
    %115 = vmatpush2.bf16.msra.mxu0 0
    %116 = vmatprep.subr.bf16.mxu0 0
    %117 = vmatpush2.bf16.msra.mxu0 0
    %118 = vmatprep.subr.bf16.mxu0 0
    %119 = vmatpush2.bf16.msra.mxu0 0
    %120 = vmatprep.subr.bf16.mxu0 0
    %121 = vmatpush2.bf16.msra.mxu0 0
    %122 = vmatprep.subr.bf16.mxu0 0
    %123 = vmatpush2.bf16.msra.mxu0 0
    %124 = vmatprep.subr.bf16.mxu0 0
    %125 = vmatpush2.bf16.msra.mxu0 0
    %126 = vmatprep.subr.bf16.mxu0 0
    %127 = vmatpush2.bf16.msra.mxu0 0
    %128 = vmatprep.subr.bf16.mxu0 0
    %129 = vmatpush2.bf16.msra.mxu0 0
    %130 = vmatprep.mubr.bf16.mxu0 0
    %131 = vmatmul.mubr.bf16.gmra.mxu0 %v87
    %v132 = vpop.f32.mrf.mxu0
    %v133 = vadd.f32 %v51, %v132
    %v134 = vpop.f32.mrf.mxu0
    %v135 = vpop.f32.mrf.mxu0
    %v136 = vadd.f32 %v51, %v135
    %v137 = vpop.f32.mrf.mxu0
    %138 = vmatprep.mubr.bf16.mxu0 0
    %139 = vmatmul.mubr.bf16.gmra.mxu0 %v90
    %v140 = vpop.f32.mrf.mxu0
    %v141 = vadd.f32 %v51, %v140
    %v142 = vpop.f32.mrf.mxu0
    %v143 = vpop.f32.mrf.mxu0
    %v144 = vadd.f32 %v51, %v143
    %v145 = vpop.f32.mrf.mxu0
    %146 = vmatprep.mubr.bf16.mxu0 0
    %147 = vmatmul.mubr.bf16.gmra.mxu0 %v93
    %v148 = vpop.f32.mrf.mxu0
    %v149 = vadd.f32 %v51, %v148
    %v150 = vpop.f32.mrf.mxu0
    %v151 = vpop.f32.mrf.mxu0
    %v152 = vadd.f32 %v51, %v151
    %v153 = vpop.f32.mrf.mxu0
    %154 = vmatprep.mubr.bf16.mxu0 0
    %155 = vmatmul.mubr.bf16.gmra.mxu0 %v96
    %v156 = vpop.f32.mrf.mxu0
    %v157 = vadd.f32 %v51, %v156
    %v158 = vpop.f32.mrf.mxu0
    %v159 = vpop.f32.mrf.mxu0
    %v160 = vadd.f32 %v51, %v159
    %v161 = vpop.f32.mrf.mxu0
    %162 = vdwg.mxu0
    %v167 = vunpack.c.l.b16 %v28
    %v168 = vunpack.c.l.b16 %v29
    %v169 = vunpack.c.l.b16 %v30
    %v170 = vunpack.c.l.b16 %v31
    %v171 = vpack.c.b16 %v168, %v167
    %v172 = vpack.c.b16 %v170, %v169
    %v176 = vsel %vm85, 0, 0
    %178 = vmatprep.subr.bf16.mxu0 0
    %179 = vmatpush1.bf16.msra.mxu0 0
    %180 = vmatprep.subr.bf16.mxu0 0
    %181 = vmatpush1.bf16.msra.mxu0 0
    %182 = vmatprep.subr.bf16.mxu0 0
    %183 = vmatpush1.bf16.msra.mxu0 0
    %184 = vmatprep.subr.bf16.mxu0 0
    %185 = vmatpush1.bf16.msra.mxu0 0
    %186 = vmatprep.subr.bf16.mxu0 0
    %187 = vmatpush1.bf16.msra.mxu0 0
    %188 = vmatprep.subr.bf16.mxu0 0
    %189 = vmatpush1.bf16.msra.mxu0 0
    %190 = vmatprep.subr.bf16.mxu0 0
    %191 = vmatpush1.bf16.msra.mxu0 %v172
    %192 = vmatprep.subr.bf16.mxu0 0
    %193 = vmatpush1.bf16.msra.mxu0 %v171
    %194 = vmatprep.subr.bf16.mxu0 0
    %195 = vmatpush2.bf16.msra.mxu0 0
    %196 = vmatprep.subr.bf16.mxu0 0
    %197 = vmatpush2.bf16.msra.mxu0 0
    %198 = vmatprep.subr.bf16.mxu0 0
    %199 = vmatpush2.bf16.msra.mxu0 0
    %200 = vmatprep.subr.bf16.mxu0 0
    %201 = vmatpush2.bf16.msra.mxu0 0
    %202 = vmatprep.subr.bf16.mxu0 0
    %203 = vmatpush2.bf16.msra.mxu0 0
    %204 = vmatprep.subr.bf16.mxu0 0
    %205 = vmatpush2.bf16.msra.mxu0 0
    %206 = vmatprep.subr.bf16.mxu0 0
    %207 = vmatpush2.bf16.msra.mxu0 0
    %208 = vmatprep.subr.bf16.mxu0 0
    %209 = vmatpush2.bf16.msra.mxu0 0
    %210 = vmatprep.mubr.bf16.mxu0 0
    %211 = vmatmul.mubr.bf16.gmra.mxu0 %v176
    %v212 = vpop.f32.mrf.mxu0
    %v213 = vadd.f32 0.0, %v212
    %v214 = vpop.f32.mrf.mxu0
    %v215 = vpop.f32.mrf.mxu0
    %v216 = vpop.f32.mrf.mxu0
    %217 = vdwg.mxu0
    %v218 = vadd.f32 %v133, %v213
    %v219 = vxor.u32 %v218, 2147483648
    %v220 = vmul.f32 %v219, 1.442695
    %v221 = vpow.pop %v220
    %v222 = vadd.f32 %v221, 1.0
    %v223 = vrcp.pop %v222
    %v224 = vmul.f32 1.0, %v223
    %v225 = vtanh.pop %v218
    %v226 = vmul.f32 %v224, 0.0
    %228 = vrot.lane.b32.xlu0 %v225, 64
    %v229 = vpop.permute.xlu0 %228
    %v231 = vmul.f32 %v224, %v229
    %233 = vrot.lane.b32.xlu0 %v231, 32
    %v234 = vpop.permute.xlu0 %233
    %v236 = vadd.f32 %v226, %v234
    %v237 = vtanh.pop %v236
    %239 = vrot.lane.b32.xlu0 %v237, 64
    %v240 = vpop.permute.xlu0 %239
    %v242 = vmul.f32 %v224, %v240
    %v243 = vpack.c.bf16 %v242, %v242
    %245 = vrot.lane.b32.xlu0 %v243, 32
    %v246 = vpop.permute.xlu0 %245
    %v248 = vsel %vm85, %v246, 0
    %250 = vmatprep.subr.bf16.mxu0 0
    %251 = vmatpush1.bf16.msra.mxu0 0
    %252 = vmatprep.subr.bf16.mxu0 0
    %253 = vmatpush1.bf16.msra.mxu0 0
    %254 = vmatprep.subr.bf16.mxu0 0
    %255 = vmatpush1.bf16.msra.mxu0 0
    %256 = vmatprep.subr.bf16.mxu0 0
    %257 = vmatpush1.bf16.msra.mxu0 0
    %258 = vmatprep.subr.bf16.mxu0 0
    %259 = vmatpush1.bf16.msra.mxu0 0
    %260 = vmatprep.subr.bf16.mxu0 0
    %261 = vmatpush1.bf16.msra.mxu0 0
    %262 = vmatprep.subr.bf16.mxu0 0
    %263 = vmatpush1.bf16.msra.mxu0 %v172
    %264 = vmatprep.subr.bf16.mxu0 0
    %265 = vmatpush1.bf16.msra.mxu0 %v171
    %266 = vmatprep.subr.bf16.mxu0 0
    %267 = vmatpush2.bf16.msra.mxu0 0
    %268 = vmatprep.subr.bf16.mxu0 0
    %269 = vmatpush2.bf16.msra.mxu0 0
    %270 = vmatprep.subr.bf16.mxu0 0
    %271 = vmatpush2.bf16.msra.mxu0 0
    %272 = vmatprep.subr.bf16.mxu0 0
    %273 = vmatpush2.bf16.msra.mxu0 0
    %274 = vmatprep.subr.bf16.mxu0 0
    %275 = vmatpush2.bf16.msra.mxu0 0
    %276 = vmatprep.subr.bf16.mxu0 0
    %277 = vmatpush2.bf16.msra.mxu0 0
    %278 = vmatprep.subr.bf16.mxu0 0
    %279 = vmatpush2.bf16.msra.mxu0 0
    %280 = vmatprep.subr.bf16.mxu0 0
    %281 = vmatpush2.bf16.msra.mxu0 0
    %282 = vmatprep.mubr.bf16.mxu0 0
    %283 = vmatmul.mubr.bf16.gmra.mxu0 %v248
    %v284 = vpop.f32.mrf.mxu0
    %v285 = vadd.f32 0.0, %v284
    %v286 = vpop.f32.mrf.mxu0
    %v287 = vpop.f32.mrf.mxu0
    %v288 = vpop.f32.mrf.mxu0
    %289 = vdwg.mxu0
    %v290 = vadd.f32 %v136, %v285
    %v291 = vxor.u32 %v290, 2147483648
    %v292 = vmul.f32 %v291, 1.442695
    %v293 = vpow.pop %v292
    %v294 = vadd.f32 %v293, 1.0
    %v295 = vrcp.pop %v294
    %v296 = vmul.f32 1.0, %v295
    %v297 = vtanh.pop %v290
    %v298 = vmul.f32 %v296, %v236
    %300 = vrot.lane.b32.xlu0 %v297, 64
    %v301 = vpop.permute.xlu0 %300
    %v303 = vmul.f32 %v296, %v301
    %305 = vrot.lane.b32.xlu0 %v303, 32
    %v306 = vpop.permute.xlu0 %305
    %v308 = vadd.f32 %v298, %v306
    %v309 = vtanh.pop %v308
    %311 = vrot.lane.b32.xlu0 %v309, 64
    %v312 = vpop.permute.xlu0 %311
    %v314 = vmul.f32 %v296, %v312
    %v315 = vpack.c.bf16 %v314, %v314
    %317 = vrot.lane.b32.xlu0 %v315, 32
    %v318 = vpop.permute.xlu0 %317
    %v320 = vsel %vm85, %v318, 0
    %322 = vmatprep.subr.bf16.mxu0 0
    %323 = vmatpush1.bf16.msra.mxu0 0
    %324 = vmatprep.subr.bf16.mxu0 0
    %325 = vmatpush1.bf16.msra.mxu0 0
    %326 = vmatprep.subr.bf16.mxu0 0
    %327 = vmatpush1.bf16.msra.mxu0 0
    %328 = vmatprep.subr.bf16.mxu0 0
    %329 = vmatpush1.bf16.msra.mxu0 0
    %330 = vmatprep.subr.bf16.mxu0 0
    %331 = vmatpush1.bf16.msra.mxu0 0
    %332 = vmatprep.subr.bf16.mxu0 0
    %333 = vmatpush1.bf16.msra.mxu0 0
    %334 = vmatprep.subr.bf16.mxu0 0
    %335 = vmatpush1.bf16.msra.mxu0 %v172
    %336 = vmatprep.subr.bf16.mxu0 0
    %337 = vmatpush1.bf16.msra.mxu0 %v171
    %338 = vmatprep.subr.bf16.mxu0 0
    %339 = vmatpush2.bf16.msra.mxu0 0
    %340 = vmatprep.subr.bf16.mxu0 0
    %341 = vmatpush2.bf16.msra.mxu0 0
    %342 = vmatprep.subr.bf16.mxu0 0
    %343 = vmatpush2.bf16.msra.mxu0 0
    %344 = vmatprep.subr.bf16.mxu0 0
    %345 = vmatpush2.bf16.msra.mxu0 0
    %346 = vmatprep.subr.bf16.mxu0 0
    %347 = vmatpush2.bf16.msra.mxu0 0
    %348 = vmatprep.subr.bf16.mxu0 0
    %349 = vmatpush2.bf16.msra.mxu0 0
    %350 = vmatprep.subr.bf16.mxu0 0
    %351 = vmatpush2.bf16.msra.mxu0 0
    %352 = vmatprep.subr.bf16.mxu0 0
    %353 = vmatpush2.bf16.msra.mxu0 0
    %354 = vmatprep.mubr.bf16.mxu0 0
    %355 = vmatmul.mubr.bf16.gmra.mxu0 %v320
    %v356 = vpop.f32.mrf.mxu0
    %v357 = vadd.f32 0.0, %v356
    %v358 = vpop.f32.mrf.mxu0
    %v359 = vpop.f32.mrf.mxu0
    %v360 = vpop.f32.mrf.mxu0
    %361 = vdwg.mxu0
    %v362 = vadd.f32 %v141, %v357
    %v363 = vxor.u32 %v362, 2147483648
    %v364 = vmul.f32 %v363, 1.442695
    %v365 = vpow.pop %v364
    %v366 = vadd.f32 %v365, 1.0
    %v367 = vrcp.pop %v366
    %v368 = vmul.f32 1.0, %v367
    %v369 = vtanh.pop %v362
    %v370 = vmul.f32 %v368, %v308
    %372 = vrot.lane.b32.xlu0 %v369, 64
    %v373 = vpop.permute.xlu0 %372
    %v375 = vmul.f32 %v368, %v373
    %377 = vrot.lane.b32.xlu0 %v375, 32
    %v378 = vpop.permute.xlu0 %377
    %v380 = vadd.f32 %v370, %v378
    %v381 = vtanh.pop %v380
    %383 = vrot.lane.b32.xlu0 %v381, 64
    %v384 = vpop.permute.xlu0 %383
    %v386 = vmul.f32 %v368, %v384
    %v387 = vpack.c.bf16 %v386, %v386
    %389 = vrot.lane.b32.xlu0 %v387, 32
    %v390 = vpop.permute.xlu0 %389
    %v392 = vsel %vm85, %v390, 0
    %394 = vmatprep.subr.bf16.mxu0 0
    %395 = vmatpush1.bf16.msra.mxu0 0
    %396 = vmatprep.subr.bf16.mxu0 0
    %397 = vmatpush1.bf16.msra.mxu0 0
    %398 = vmatprep.subr.bf16.mxu0 0
    %399 = vmatpush1.bf16.msra.mxu0 0
    %400 = vmatprep.subr.bf16.mxu0 0
    %401 = vmatpush1.bf16.msra.mxu0 0
    %402 = vmatprep.subr.bf16.mxu0 0
    %403 = vmatpush1.bf16.msra.mxu0 0
    %404 = vmatprep.subr.bf16.mxu0 0
    %405 = vmatpush1.bf16.msra.mxu0 0
    %406 = vmatprep.subr.bf16.mxu0 0
    %407 = vmatpush1.bf16.msra.mxu0 %v172
    %408 = vmatprep.subr.bf16.mxu0 0
    %409 = vmatpush1.bf16.msra.mxu0 %v171
    %410 = vmatprep.subr.bf16.mxu0 0
    %411 = vmatpush2.bf16.msra.mxu0 0
    %412 = vmatprep.subr.bf16.mxu0 0
    %413 = vmatpush2.bf16.msra.mxu0 0
    %414 = vmatprep.subr.bf16.mxu0 0
    %415 = vmatpush2.bf16.msra.mxu0 0
    %416 = vmatprep.subr.bf16.mxu0 0
    %417 = vmatpush2.bf16.msra.mxu0 0
    %418 = vmatprep.subr.bf16.mxu0 0
    %419 = vmatpush2.bf16.msra.mxu0 0
    %420 = vmatprep.subr.bf16.mxu0 0
    %421 = vmatpush2.bf16.msra.mxu0 0
    %422 = vmatprep.subr.bf16.mxu0 0
    %423 = vmatpush2.bf16.msra.mxu0 0
    %424 = vmatprep.subr.bf16.mxu0 0
    %425 = vmatpush2.bf16.msra.mxu0 0
    %426 = vmatprep.mubr.bf16.mxu0 0
    %427 = vmatmul.mubr.bf16.gmra.mxu0 %v392
    %v428 = vpop.f32.mrf.mxu0
    %v429 = vadd.f32 0.0, %v428
    %v430 = vpop.f32.mrf.mxu0
    %v431 = vpop.f32.mrf.mxu0
    %v432 = vpop.f32.mrf.mxu0
    %433 = vdwg.mxu0
    %v434 = vadd.f32 %v144, %v429
    %v435 = vxor.u32 %v434, 2147483648
    %v436 = vmul.f32 %v435, 1.442695
    %v437 = vpow.pop %v436
    %v438 = vadd.f32 %v437, 1.0
    %v439 = vrcp.pop %v438
    %v440 = vmul.f32 1.0, %v439
    %v441 = vtanh.pop %v434
    %v442 = vmul.f32 %v440, %v380
    %444 = vrot.lane.b32.xlu0 %v441, 64
    %v445 = vpop.permute.xlu0 %444
    %v447 = vmul.f32 %v440, %v445
    %449 = vrot.lane.b32.xlu0 %v447, 32
    %v450 = vpop.permute.xlu0 %449
    %v452 = vadd.f32 %v442, %v450
    %v453 = vtanh.pop %v452
    %455 = vrot.lane.b32.xlu0 %v453, 64
    %v456 = vpop.permute.xlu0 %455
    %v458 = vmul.f32 %v440, %v456
    %v459 = vpack.c.bf16 %v458, %v458
    %461 = vrot.lane.b32.xlu0 %v459, 32
    %v462 = vpop.permute.xlu0 %461
    %v464 = vsel %vm85, %v462, 0
    %466 = vmatprep.subr.bf16.mxu0 0
    %467 = vmatpush1.bf16.msra.mxu0 0
    %468 = vmatprep.subr.bf16.mxu0 0
    %469 = vmatpush1.bf16.msra.mxu0 0
    %470 = vmatprep.subr.bf16.mxu0 0
    %471 = vmatpush1.bf16.msra.mxu0 0
    %472 = vmatprep.subr.bf16.mxu0 0
    %473 = vmatpush1.bf16.msra.mxu0 0
    %474 = vmatprep.subr.bf16.mxu0 0
    %475 = vmatpush1.bf16.msra.mxu0 0
    %476 = vmatprep.subr.bf16.mxu0 0
    %477 = vmatpush1.bf16.msra.mxu0 0
    %478 = vmatprep.subr.bf16.mxu0 0
    %479 = vmatpush1.bf16.msra.mxu0 %v172
    %480 = vmatprep.subr.bf16.mxu0 0
    %481 = vmatpush1.bf16.msra.mxu0 %v171
    %482 = vmatprep.subr.bf16.mxu0 0
    %483 = vmatpush2.bf16.msra.mxu0 0
    %484 = vmatprep.subr.bf16.mxu0 0
    %485 = vmatpush2.bf16.msra.mxu0 0
    %486 = vmatprep.subr.bf16.mxu0 0
    %487 = vmatpush2.bf16.msra.mxu0 0
    %488 = vmatprep.subr.bf16.mxu0 0
    %489 = vmatpush2.bf16.msra.mxu0 0
    %490 = vmatprep.subr.bf16.mxu0 0
    %491 = vmatpush2.bf16.msra.mxu0 0
    %492 = vmatprep.subr.bf16.mxu0 0
    %493 = vmatpush2.bf16.msra.mxu0 0
    %494 = vmatprep.subr.bf16.mxu0 0
    %495 = vmatpush2.bf16.msra.mxu0 0
    %496 = vmatprep.subr.bf16.mxu0 0
    %497 = vmatpush2.bf16.msra.mxu0 0
    %498 = vmatprep.mubr.bf16.mxu0 0
    %499 = vmatmul.mubr.bf16.gmra.mxu0 %v464
    %v500 = vpop.f32.mrf.mxu0
    %v501 = vadd.f32 0.0, %v500
    %v502 = vpop.f32.mrf.mxu0
    %v503 = vpop.f32.mrf.mxu0
    %v504 = vpop.f32.mrf.mxu0
    %505 = vdwg.mxu0
    %v506 = vadd.f32 %v149, %v501
    %v507 = vxor.u32 %v506, 2147483648
    %v508 = vmul.f32 %v507, 1.442695
    %v509 = vpow.pop %v508
    %v510 = vadd.f32 %v509, 1.0
    %v511 = vrcp.pop %v510
    %v512 = vmul.f32 1.0, %v511
    %v513 = vtanh.pop %v506
    %v514 = vmul.f32 %v512, %v452
    %516 = vrot.lane.b32.xlu0 %v513, 64
    %v517 = vpop.permute.xlu0 %516
    %v519 = vmul.f32 %v512, %v517
    %521 = vrot.lane.b32.xlu0 %v519, 32
    %v522 = vpop.permute.xlu0 %521
    %v524 = vadd.f32 %v514, %v522
    %v525 = vtanh.pop %v524
    %527 = vrot.lane.b32.xlu0 %v525, 64
    %v528 = vpop.permute.xlu0 %527
    %v530 = vmul.f32 %v512, %v528
    %v531 = vpack.c.bf16 %v530, %v530
    %533 = vrot.lane.b32.xlu0 %v531, 32
    %v534 = vpop.permute.xlu0 %533
    %v536 = vsel %vm85, %v534, 0
    %538 = vmatprep.subr.bf16.mxu0 0
    %539 = vmatpush1.bf16.msra.mxu0 0
    %540 = vmatprep.subr.bf16.mxu0 0
    %541 = vmatpush1.bf16.msra.mxu0 0
    %542 = vmatprep.subr.bf16.mxu0 0
    %543 = vmatpush1.bf16.msra.mxu0 0
    %544 = vmatprep.subr.bf16.mxu0 0
    %545 = vmatpush1.bf16.msra.mxu0 0
    %546 = vmatprep.subr.bf16.mxu0 0
    %547 = vmatpush1.bf16.msra.mxu0 0
    %548 = vmatprep.subr.bf16.mxu0 0
    %549 = vmatpush1.bf16.msra.mxu0 0
    %550 = vmatprep.subr.bf16.mxu0 0
    %551 = vmatpush1.bf16.msra.mxu0 %v172
    %552 = vmatprep.subr.bf16.mxu0 0
    %553 = vmatpush1.bf16.msra.mxu0 %v171
    %554 = vmatprep.subr.bf16.mxu0 0
    %555 = vmatpush2.bf16.msra.mxu0 0
    %556 = vmatprep.subr.bf16.mxu0 0
    %557 = vmatpush2.bf16.msra.mxu0 0
    %558 = vmatprep.subr.bf16.mxu0 0
    %559 = vmatpush2.bf16.msra.mxu0 0
    %560 = vmatprep.subr.bf16.mxu0 0
    %561 = vmatpush2.bf16.msra.mxu0 0
    %562 = vmatprep.subr.bf16.mxu0 0
    %563 = vmatpush2.bf16.msra.mxu0 0
    %564 = vmatprep.subr.bf16.mxu0 0
    %565 = vmatpush2.bf16.msra.mxu0 0
    %566 = vmatprep.subr.bf16.mxu0 0
    %567 = vmatpush2.bf16.msra.mxu0 0
    %568 = vmatprep.subr.bf16.mxu0 0
    %569 = vmatpush2.bf16.msra.mxu0 0
    %570 = vmatprep.mubr.bf16.mxu0 0
    %571 = vmatmul.mubr.bf16.gmra.mxu0 %v536
    %v572 = vpop.f32.mrf.mxu0
    %v573 = vadd.f32 0.0, %v572
    %v574 = vpop.f32.mrf.mxu0
    %v575 = vpop.f32.mrf.mxu0
    %v576 = vpop.f32.mrf.mxu0
    %577 = vdwg.mxu0
    %v578 = vadd.f32 %v152, %v573
    %v579 = vxor.u32 %v578, 2147483648
    %v580 = vmul.f32 %v579, 1.442695
    %v581 = vpow.pop %v580
    %v582 = vadd.f32 %v581, 1.0
    %v583 = vrcp.pop %v582
    %v584 = vmul.f32 1.0, %v583
    %v585 = vtanh.pop %v578
    %v586 = vmul.f32 %v584, %v524
    %588 = vrot.lane.b32.xlu0 %v585, 64
    %v589 = vpop.permute.xlu0 %588
    %v591 = vmul.f32 %v584, %v589
    %593 = vrot.lane.b32.xlu0 %v591, 32
    %v594 = vpop.permute.xlu0 %593
    %v596 = vadd.f32 %v586, %v594
    %v597 = vtanh.pop %v596
    %599 = vrot.lane.b32.xlu0 %v597, 64
    %v600 = vpop.permute.xlu0 %599
    %v602 = vmul.f32 %v584, %v600
    %v603 = vpack.c.bf16 %v602, %v602
    %605 = vrot.lane.b32.xlu0 %v603, 32
    %v606 = vpop.permute.xlu0 %605
    %v608 = vsel %vm85, %v606, 0
    %610 = vmatprep.subr.bf16.mxu0 0
    %611 = vmatpush1.bf16.msra.mxu0 0
    %612 = vmatprep.subr.bf16.mxu0 0
    %613 = vmatpush1.bf16.msra.mxu0 0
    %614 = vmatprep.subr.bf16.mxu0 0
    %615 = vmatpush1.bf16.msra.mxu0 0
    %616 = vmatprep.subr.bf16.mxu0 0
    %617 = vmatpush1.bf16.msra.mxu0 0
    %618 = vmatprep.subr.bf16.mxu0 0
    %619 = vmatpush1.bf16.msra.mxu0 0
    %620 = vmatprep.subr.bf16.mxu0 0
    %621 = vmatpush1.bf16.msra.mxu0 0
    %622 = vmatprep.subr.bf16.mxu0 0
    %623 = vmatpush1.bf16.msra.mxu0 %v172
    %624 = vmatprep.subr.bf16.mxu0 0
    %625 = vmatpush1.bf16.msra.mxu0 %v171
    %626 = vmatprep.subr.bf16.mxu0 0
    %627 = vmatpush2.bf16.msra.mxu0 0
    %628 = vmatprep.subr.bf16.mxu0 0
    %629 = vmatpush2.bf16.msra.mxu0 0
    %630 = vmatprep.subr.bf16.mxu0 0
    %631 = vmatpush2.bf16.msra.mxu0 0
    %632 = vmatprep.subr.bf16.mxu0 0
    %633 = vmatpush2.bf16.msra.mxu0 0
    %634 = vmatprep.subr.bf16.mxu0 0
    %635 = vmatpush2.bf16.msra.mxu0 0
    %636 = vmatprep.subr.bf16.mxu0 0
    %637 = vmatpush2.bf16.msra.mxu0 0
    %638 = vmatprep.subr.bf16.mxu0 0
    %639 = vmatpush2.bf16.msra.mxu0 0
    %640 = vmatprep.subr.bf16.mxu0 0
    %641 = vmatpush2.bf16.msra.mxu0 0
    %642 = vmatprep.mubr.bf16.mxu0 0
    %643 = vmatmul.mubr.bf16.gmra.mxu0 %v608
    %v644 = vpop.f32.mrf.mxu0
    %v645 = vadd.f32 0.0, %v644
    %v646 = vpop.f32.mrf.mxu0
    %v647 = vpop.f32.mrf.mxu0
    %v648 = vpop.f32.mrf.mxu0
    %649 = vdwg.mxu0
    %v650 = vadd.f32 %v157, %v645
    %v651 = vxor.u32 %v650, 2147483648
    %v652 = vmul.f32 %v651, 1.442695
    %v653 = vpow.pop %v652
    %v654 = vadd.f32 %v653, 1.0
    %v655 = vrcp.pop %v654
    %v656 = vmul.f32 1.0, %v655
    %v657 = vtanh.pop %v650
    %v658 = vmul.f32 %v656, %v596
    %660 = vrot.lane.b32.xlu0 %v657, 64
    %v661 = vpop.permute.xlu0 %660
    %v663 = vmul.f32 %v656, %v661
    %665 = vrot.lane.b32.xlu0 %v663, 32
    %v666 = vpop.permute.xlu0 %665
    %v668 = vadd.f32 %v658, %v666
    %v669 = vtanh.pop %v668
    %671 = vrot.lane.b32.xlu0 %v669, 64
    %v672 = vpop.permute.xlu0 %671
    %v674 = vmul.f32 %v656, %v672
    %v675 = vpack.c.bf16 %v674, %v674
    %677 = vrot.lane.b32.xlu0 %v675, 32
    %v678 = vpop.permute.xlu0 %677
    %v680 = vsel %vm85, %v678, 0
    %682 = vmatprep.subr.bf16.mxu0 0
    %683 = vmatpush1.bf16.msra.mxu0 0
    %684 = vmatprep.subr.bf16.mxu0 0
    %685 = vmatpush1.bf16.msra.mxu0 0
    %686 = vmatprep.subr.bf16.mxu0 0
    %687 = vmatpush1.bf16.msra.mxu0 0
    %688 = vmatprep.subr.bf16.mxu0 0
    %689 = vmatpush1.bf16.msra.mxu0 0
    %690 = vmatprep.subr.bf16.mxu0 0
    %691 = vmatpush1.bf16.msra.mxu0 0
    %692 = vmatprep.subr.bf16.mxu0 0
    %693 = vmatpush1.bf16.msra.mxu0 0
    %694 = vmatprep.subr.bf16.mxu0 0
    %695 = vmatpush1.bf16.msra.mxu0 %v172
    %696 = vmatprep.subr.bf16.mxu0 0
    %697 = vmatpush1.bf16.msra.mxu0 %v171
    %698 = vmatprep.subr.bf16.mxu0 0
    %699 = vmatpush2.bf16.msra.mxu0 0
    %700 = vmatprep.subr.bf16.mxu0 0
    %701 = vmatpush2.bf16.msra.mxu0 0
    %702 = vmatprep.subr.bf16.mxu0 0
    %703 = vmatpush2.bf16.msra.mxu0 0
    %704 = vmatprep.subr.bf16.mxu0 0
    %705 = vmatpush2.bf16.msra.mxu0 0
    %706 = vmatprep.subr.bf16.mxu0 0
    %707 = vmatpush2.bf16.msra.mxu0 0
    %708 = vmatprep.subr.bf16.mxu0 0
    %709 = vmatpush2.bf16.msra.mxu0 0
    %710 = vmatprep.subr.bf16.mxu0 0
    %711 = vmatpush2.bf16.msra.mxu0 0
    %712 = vmatprep.subr.bf16.mxu0 0
    %713 = vmatpush2.bf16.msra.mxu0 0
    %714 = vmatprep.mubr.bf16.mxu0 0
    %715 = vmatmul.mubr.bf16.gmra.mxu0 %v680
    %v716 = vpop.f32.mrf.mxu0
    %v717 = vadd.f32 0.0, %v716
    %v718 = vpop.f32.mrf.mxu0
    %v719 = vpop.f32.mrf.mxu0
    %v720 = vpop.f32.mrf.mxu0
    %721 = vdwg.mxu0
    %v722 = vadd.f32 %v160, %v717
    %v723 = vxor.u32 %v722, 2147483648
    %v724 = vmul.f32 %v723, 1.442695
    %v725 = vpow.pop %v724
    %v726 = vadd.f32 %v725, 1.0
    %v727 = vrcp.pop %v726
    %v728 = vmul.f32 1.0, %v727
    %v729 = vtanh.pop %v722
    %v730 = vmul.f32 %v728, %v668
    %732 = vrot.lane.b32.xlu0 %v729, 64
    %v733 = vpop.permute.xlu0 %732
    %v735 = vmul.f32 %v728, %v733
    %737 = vrot.lane.b32.xlu0 %v735, 32
    %v738 = vpop.permute.xlu0 %737
    %v740 = vadd.f32 %v730, %v738
    %v741 = vtanh.pop %v740
    %743 = vrot.lane.b32.xlu0 %v741, 64
    %v744 = vpop.permute.xlu0 %743
    %v746 = vmul.f32 %v728, %v744
    %v747 = vtanh.pop %v242
    %v748 = vtanh.pop %v314
    %v749 = vtanh.pop %v386
    %v750 = vtanh.pop %v458
    %v751 = vtanh.pop %v530
    %v752 = vtanh.pop %v602
    %v753 = vtanh.pop %v674
    %v754 = vtanh.pop %v746
    %v755 = vpack.c.bf16 %v748, %v747
    %v756 = vpack.c.bf16 %v750, %v749
    %v757 = vpack.c.bf16 %v752, %v751
    %v758 = vpack.c.bf16 %v754, %v753
    %v759 = vld [vmem:[%s4] sm:$0xf]
    %v760 = vld [vmem:[%s4 + $0x4] sm:$0xf]
    %v761 = vld [vmem:[%s4 + $0x8] sm:$0xf]
    %v762 = vld [vmem:[%s4 + $0xc] sm:$0xf]
    %v764 = vlaneseq
    %v765 = vshrl.u32 %v764, 7
    %v766 = vsub.s32 0, %v765
    %v767 = vrot.slane %v33, %v766
    %773 = vrot.lane.b32.xlu0 %v755, 32
    %v774 = vpop.permute.xlu0 %773
    %775 = vrot.lane.b32.xlu0 %v756, 32
    %v776 = vpop.permute.xlu0 %775
    %777 = vrot.lane.b32.xlu0 %v757, 32
    %v778 = vpop.permute.xlu0 %777
    %779 = vrot.lane.b32.xlu0 %v758, 32
    %v780 = vpop.permute.xlu0 %779
    %v785 = vunpack.c.l.b16 %v759
    %v786 = vunpack.c.l.b16 %v760
    %v787 = vunpack.c.l.b16 %v761
    %v788 = vunpack.c.l.b16 %v762
    %v789 = vpack.c.b16 %v786, %v785
    %v790 = vpack.c.b16 %v788, %v787
    %v794 = vsel %vm85, %v774, 0
    %v797 = vsel %vm85, %v776, 0
    %v800 = vsel %vm85, %v778, 0
    %v803 = vsel %vm85, %v780, 0
    %805 = vmatprep.subr.bf16.mxu0 0
    %806 = vmatpush1.bf16.msra.mxu0 0
    %807 = vmatprep.subr.bf16.mxu0 0
    %808 = vmatpush1.bf16.msra.mxu0 0
    %809 = vmatprep.subr.bf16.mxu0 0
    %810 = vmatpush1.bf16.msra.mxu0 0
    %811 = vmatprep.subr.bf16.mxu0 0
    %812 = vmatpush1.bf16.msra.mxu0 0
    %813 = vmatprep.subr.bf16.mxu0 0
    %814 = vmatpush1.bf16.msra.mxu0 0
    %815 = vmatprep.subr.bf16.mxu0 0
    %816 = vmatpush1.bf16.msra.mxu0 0
    %817 = vmatprep.subr.bf16.mxu0 0
    %818 = vmatpush1.bf16.msra.mxu0 %v790
    %819 = vmatprep.subr.bf16.mxu0 0
    %820 = vmatpush1.bf16.msra.mxu0 %v789
    %821 = vmatprep.subr.bf16.mxu0 0
    %822 = vmatpush2.bf16.msra.mxu0 0
    %823 = vmatprep.subr.bf16.mxu0 0
    %824 = vmatpush2.bf16.msra.mxu0 0
    %825 = vmatprep.subr.bf16.mxu0 0
    %826 = vmatpush2.bf16.msra.mxu0 0
    %827 = vmatprep.subr.bf16.mxu0 0
    %828 = vmatpush2.bf16.msra.mxu0 0
    %829 = vmatprep.subr.bf16.mxu0 0
    %830 = vmatpush2.bf16.msra.mxu0 0
    %831 = vmatprep.subr.bf16.mxu0 0
    %832 = vmatpush2.bf16.msra.mxu0 0
    %833 = vmatprep.subr.bf16.mxu0 0
    %834 = vmatpush2.bf16.msra.mxu0 0
    %835 = vmatprep.subr.bf16.mxu0 0
    %836 = vmatpush2.bf16.msra.mxu0 0
    %837 = vmatprep.mubr.bf16.mxu0 0
    %838 = vmatmul.mubr.bf16.gmra.mxu0 %v794
    %v839 = vpop.f32.mrf.mxu0
    %v840 = vadd.f32 %v767, %v839
    %v841 = vpop.f32.mrf.mxu0
    %v842 = vpop.f32.mrf.mxu0
    %v843 = vadd.f32 %v767, %v842
    %v844 = vpop.f32.mrf.mxu0
    %845 = vmatprep.mubr.bf16.mxu0 0
    %846 = vmatmul.mubr.bf16.gmra.mxu0 %v797
    %v847 = vpop.f32.mrf.mxu0
    %v848 = vadd.f32 %v767, %v847
    %v849 = vpop.f32.mrf.mxu0
    %v850 = vpop.f32.mrf.mxu0
    %v851 = vadd.f32 %v767, %v850
    %v852 = vpop.f32.mrf.mxu0
    %853 = vmatprep.mubr.bf16.mxu0 0
    %854 = vmatmul.mubr.bf16.gmra.mxu0 %v800
    %v855 = vpop.f32.mrf.mxu0
    %v856 = vadd.f32 %v767, %v855
    %v857 = vpop.f32.mrf.mxu0
    %v858 = vpop.f32.mrf.mxu0
    %v859 = vadd.f32 %v767, %v858
    %v860 = vpop.f32.mrf.mxu0
    %861 = vmatprep.mubr.bf16.mxu0 0
    %862 = vmatmul.mubr.bf16.gmra.mxu0 %v803
    %v863 = vpop.f32.mrf.mxu0
    %v864 = vadd.f32 %v767, %v863
    %v865 = vpop.f32.mrf.mxu0
    %v866 = vpop.f32.mrf.mxu0
    %v867 = vadd.f32 %v767, %v866
    %v868 = vpop.f32.mrf.mxu0
    %869 = vdwg.mxu0
    %v870 = vlaneseq
    %v871 = vand.u32 %v870, 127
    %v873 = vlaneseq
    %v874 = vshrl.u32 %v873, 7
    %v875 = vsub.s32 0, %v874
    %v876 = vrot.slane %v32, %v875
    %v878 = vmul.f32 %v876, 0.0
    %v879 = vadd.f32 %v840, %v878
    %v880 = vxor.u32 %v879, 2147483648
    %v881 = vmul.f32 %v880, 1.442695
    %v882 = vpow.pop %v881
    %v883 = vadd.f32 %v882, 1.0
    %v884 = vrcp.pop %v883
    %v885 = vmul.f32 1.0, %v884
    %v886 = vtanh.pop %v879
    %v887 = vmul.f32 %v885, 0.0
    %889 = vrot.lane.b32.xlu0 %v886, 126
    %v890 = vpop.permute.xlu0 %889
    %v892 = vmul.f32 %v885, %v890
    %894 = vrot.lane.b32.xlu0 %v892, 1
    %v895 = vpop.permute.xlu0 %894
    %v897 = vadd.f32 %v887, %v895
    %v898 = vtanh.pop %v897
    %900 = vrot.lane.b32.xlu0 %v898, 2
    %v901 = vpop.permute.xlu0 %900
    %v903 = vmul.f32 %v885, %v901
    %vm904 = vcmp.eq.s32.totalorder %v871, 0
    %v905 = vtanh.pop %v903
    %907 = vset.pattern.permute.xlu0 3
    %908 = vperm.xlu0 %907, %v905
    %v909 = vpop.permute.xlu0 %908
    %v911 = vsel %vm904, %v909, 0.0
    %913 = vset.pattern.permute.xlu0 3
    %914 = vperm.xlu0 %913, %v903
    %v915 = vpop.permute.xlu0 %914
    %v917 = vmul.f32 %v915, %v876
    %v918 = vadd.f32 %v843, %v917
    %v919 = vxor.u32 %v918, 2147483648
    %v920 = vmul.f32 %v919, 1.442695
    %v921 = vpow.pop %v920
    %v922 = vadd.f32 %v921, 1.0
    %v923 = vrcp.pop %v922
    %v924 = vmul.f32 1.0, %v923
    %v925 = vtanh.pop %v918
    %v926 = vmul.f32 %v924, %v897
    %928 = vrot.lane.b32.xlu0 %v925, 126
    %v929 = vpop.permute.xlu0 %928
    %v931 = vmul.f32 %v924, %v929
    %933 = vrot.lane.b32.xlu0 %v931, 1
    %v934 = vpop.permute.xlu0 %933
    %v936 = vadd.f32 %v926, %v934
    %v937 = vtanh.pop %v936
    %939 = vrot.lane.b32.xlu0 %v937, 2
    %v940 = vpop.permute.xlu0 %939
    %v942 = vmul.f32 %v924, %v940
    %vm943 = vcmp.eq.s32.totalorder %v871, 1
    %v944 = vtanh.pop %v942
    %946 = vset.pattern.permute.xlu0 3
    %947 = vperm.xlu0 %946, %v944
    %v948 = vpop.permute.xlu0 %947
    %v950 = vsel %vm943, %v948, %v911
    %952 = vset.pattern.permute.xlu0 3
    %953 = vperm.xlu0 %952, %v942
    %v954 = vpop.permute.xlu0 %953
    %v956 = vmul.f32 %v954, %v876
    %v957 = vadd.f32 %v848, %v956
    %v958 = vxor.u32 %v957, 2147483648
    %v959 = vmul.f32 %v958, 1.442695
    %v960 = vpow.pop %v959
    %v961 = vadd.f32 %v960, 1.0
    %v962 = vrcp.pop %v961
    %v963 = vmul.f32 1.0, %v962
    %v964 = vtanh.pop %v957
    %v965 = vmul.f32 %v963, %v936
    %967 = vrot.lane.b32.xlu0 %v964, 126
    %v968 = vpop.permute.xlu0 %967
    %v970 = vmul.f32 %v963, %v968
    %972 = vrot.lane.b32.xlu0 %v970, 1
    %v973 = vpop.permute.xlu0 %972
    %v975 = vadd.f32 %v965, %v973
    %v976 = vtanh.pop %v975
    %978 = vrot.lane.b32.xlu0 %v976, 2
    %v979 = vpop.permute.xlu0 %978
    %v981 = vmul.f32 %v963, %v979
    %vm982 = vcmp.eq.s32.totalorder %v871, 2
    %v983 = vtanh.pop %v981
    %985 = vset.pattern.permute.xlu0 3
    %986 = vperm.xlu0 %985, %v983
    %v987 = vpop.permute.xlu0 %986
    %v989 = vsel %vm982, %v987, %v950
    %991 = vset.pattern.permute.xlu0 3
    %992 = vperm.xlu0 %991, %v981
    %v993 = vpop.permute.xlu0 %992
    %v995 = vmul.f32 %v993, %v876
    %v996 = vadd.f32 %v851, %v995
    %v997 = vxor.u32 %v996, 2147483648
    %v998 = vmul.f32 %v997, 1.442695
    %v999 = vpow.pop %v998
    %v1000 = vadd.f32 %v999, 1.0
    %v1001 = vrcp.pop %v1000
    %v1002 = vmul.f32 1.0, %v1001
    %v1003 = vtanh.pop %v996
    %v1004 = vmul.f32 %v1002, %v975
    %1006 = vrot.lane.b32.xlu0 %v1003, 126
    %v1007 = vpop.permute.xlu0 %1006
    %v1009 = vmul.f32 %v1002, %v1007
    %1011 = vrot.lane.b32.xlu0 %v1009, 1
    %v1012 = vpop.permute.xlu0 %1011
    %v1014 = vadd.f32 %v1004, %v1012
    %v1015 = vtanh.pop %v1014
    %1017 = vrot.lane.b32.xlu0 %v1015, 2
    %v1018 = vpop.permute.xlu0 %1017
    %v1020 = vmul.f32 %v1002, %v1018
    %vm1021 = vcmp.eq.s32.totalorder %v871, 3
    %v1022 = vtanh.pop %v1020
    %1024 = vset.pattern.permute.xlu0 3
    %1025 = vperm.xlu0 %1024, %v1022
    %v1026 = vpop.permute.xlu0 %1025
    %v1028 = vsel %vm1021, %v1026, %v989
    %1030 = vset.pattern.permute.xlu0 3
    %1031 = vperm.xlu0 %1030, %v1020
    %v1032 = vpop.permute.xlu0 %1031
    %v1034 = vmul.f32 %v1032, %v876
    %v1035 = vadd.f32 %v856, %v1034
    %v1036 = vxor.u32 %v1035, 2147483648
    %v1037 = vmul.f32 %v1036, 1.442695
    %v1038 = vpow.pop %v1037
    %v1039 = vadd.f32 %v1038, 1.0
    %v1040 = vrcp.pop %v1039
    %v1041 = vmul.f32 1.0, %v1040
    %v1042 = vtanh.pop %v1035
    %v1043 = vmul.f32 %v1041, %v1014
    %1045 = vrot.lane.b32.xlu0 %v1042, 126
    %v1046 = vpop.permute.xlu0 %1045
    %v1048 = vmul.f32 %v1041, %v1046
    %1050 = vrot.lane.b32.xlu0 %v1048, 1
    %v1051 = vpop.permute.xlu0 %1050
    %v1053 = vadd.f32 %v1043, %v1051
    %v1054 = vtanh.pop %v1053
    %1056 = vrot.lane.b32.xlu0 %v1054, 2
    %v1057 = vpop.permute.xlu0 %1056
    %v1059 = vmul.f32 %v1041, %v1057
    %vm1060 = vcmp.eq.s32.totalorder %v871, 4
    %v1061 = vtanh.pop %v1059
    %1063 = vset.pattern.permute.xlu0 3
    %1064 = vperm.xlu0 %1063, %v1061
    %v1065 = vpop.permute.xlu0 %1064
    %v1067 = vsel %vm1060, %v1065, %v1028
    %1069 = vset.pattern.permute.xlu0 3
    %1070 = vperm.xlu0 %1069, %v1059
    %v1071 = vpop.permute.xlu0 %1070
    %v1073 = vmul.f32 %v1071, %v876
    %v1074 = vadd.f32 %v859, %v1073
    %v1075 = vxor.u32 %v1074, 2147483648
    %v1076 = vmul.f32 %v1075, 1.442695
    %v1077 = vpow.pop %v1076
    %v1078 = vadd.f32 %v1077, 1.0
    %v1079 = vrcp.pop %v1078
    %v1080 = vmul.f32 1.0, %v1079
    %v1081 = vtanh.pop %v1074
    %v1082 = vmul.f32 %v1080, %v1053
    %1084 = vrot.lane.b32.xlu0 %v1081, 126
    %v1085 = vpop.permute.xlu0 %1084
    %v1087 = vmul.f32 %v1080, %v1085
    %1089 = vrot.lane.b32.xlu0 %v1087, 1
    %v1090 = vpop.permute.xlu0 %1089
    %v1092 = vadd.f32 %v1082, %v1090
    %v1093 = vtanh.pop %v1092
    %1095 = vrot.lane.b32.xlu0 %v1093, 2
    %v1096 = vpop.permute.xlu0 %1095
    %v1098 = vmul.f32 %v1080, %v1096
    %vm1099 = vcmp.eq.s32.totalorder %v871, 5
    %v1100 = vtanh.pop %v1098
    %1102 = vset.pattern.permute.xlu0 3
    %1103 = vperm.xlu0 %1102, %v1100
    %v1104 = vpop.permute.xlu0 %1103
    %v1106 = vsel %vm1099, %v1104, %v1067
    %1108 = vset.pattern.permute.xlu0 3
    %1109 = vperm.xlu0 %1108, %v1098
    %v1110 = vpop.permute.xlu0 %1109
    %v1112 = vmul.f32 %v1110, %v876
    %v1113 = vadd.f32 %v864, %v1112
    %v1114 = vxor.u32 %v1113, 2147483648
    %v1115 = vmul.f32 %v1114, 1.442695
    %v1116 = vpow.pop %v1115
    %v1117 = vadd.f32 %v1116, 1.0
    %v1118 = vrcp.pop %v1117
    %v1119 = vmul.f32 1.0, %v1118
    %v1120 = vtanh.pop %v1113
    %v1121 = vmul.f32 %v1119, %v1092
    %1123 = vrot.lane.b32.xlu0 %v1120, 126
    %v1124 = vpop.permute.xlu0 %1123
    %v1126 = vmul.f32 %v1119, %v1124
    %1128 = vrot.lane.b32.xlu0 %v1126, 1
    %v1129 = vpop.permute.xlu0 %1128
    %v1131 = vadd.f32 %v1121, %v1129
    %v1132 = vtanh.pop %v1131
    %1134 = vrot.lane.b32.xlu0 %v1132, 2
    %v1135 = vpop.permute.xlu0 %1134
    %v1137 = vmul.f32 %v1119, %v1135
    %vm1138 = vcmp.eq.s32.totalorder %v871, 6
    %v1139 = vtanh.pop %v1137
    %1141 = vset.pattern.permute.xlu0 3
    %1142 = vperm.xlu0 %1141, %v1139
    %v1143 = vpop.permute.xlu0 %1142
    %v1145 = vsel %vm1138, %v1143, %v1106
    %1147 = vset.pattern.permute.xlu0 3
    %1148 = vperm.xlu0 %1147, %v1137
    %v1149 = vpop.permute.xlu0 %1148
    %v1151 = vmul.f32 %v1149, %v876
    %v1152 = vadd.f32 %v867, %v1151
    %v1153 = vxor.u32 %v1152, 2147483648
    %v1154 = vmul.f32 %v1153, 1.442695
    %v1155 = vpow.pop %v1154
    %v1156 = vadd.f32 %v1155, 1.0
    %v1157 = vrcp.pop %v1156
    %v1158 = vmul.f32 1.0, %v1157
    %v1159 = vtanh.pop %v1152
    %v1160 = vmul.f32 %v1158, %v1131
    %1162 = vrot.lane.b32.xlu0 %v1159, 126
    %v1163 = vpop.permute.xlu0 %1162
    %v1165 = vmul.f32 %v1158, %v1163
    %1167 = vrot.lane.b32.xlu0 %v1165, 1
    %v1168 = vpop.permute.xlu0 %1167
    %v1170 = vadd.f32 %v1160, %v1168
    %v1171 = vtanh.pop %v1170
    %1173 = vrot.lane.b32.xlu0 %v1171, 2
    %v1174 = vpop.permute.xlu0 %1173
    %v1176 = vmul.f32 %v1158, %v1174
    %vm1177 = vcmp.eq.s32.totalorder %v871, 7
    %v1178 = vtanh.pop %v1176
    %1180 = vset.pattern.permute.xlu0 3
    %1181 = vperm.xlu0 %1180, %v1178
    %v1182 = vpop.permute.xlu0 %1181
    %v1184 = vsel %vm1177, %v1182, %v1145
    %vm1185 = vcmask 58368
    %1186 = vst.msk [vmem:[#allocation2] sm:$0x3] %vm1185, %v1184
    // Predicated region
    $region30: #{ae_decoder_forward.1} parent=1 // pred_check
      _
    $region31: #{ae_decoder_forward.1} parent=1 // pred_check_branch
      %1188 = sbr.rel (0) target = $region33
    $region32: #{ae_decoder_forward.1} parent=1 // pred_region
      %s1190 = ssub.s32 32, 32
      %1191 = vsyncadd [#allocation3], %s1190
      %s1193 = sshll.u32 [#allocation2], 4
      %s1194 = int_to_ptr.vmem [resolvable:$true] %s1193
      %1196 = dma.vmem_to_hbm [thread:$0]  %s1194, 32, %s7, [#allocation3]
    $region33: #{ae_decoder_forward.1} parent=1 // pred_fallthru
      _
    // Predicated region
    $region34: #{ae_decoder_forward.1} parent=1 // pred_check
      _
    $region35: #{ae_decoder_forward.1} parent=1 // pred_check_branch
      %1198 = sbr.rel (0) target = $region37
    $region36: #{ae_decoder_forward.1} parent=1 // pred_region
      %1199 = dma.done [#allocation3], 32
    $region37: #{ae_decoder_forward.1} parent=1 // pred_fallthru
      _
    %1200 = vsyncpa [#allocation3], 1

</llo_original>
